<compile_context>
chip_gen: v6e
topology: v6e:2x2x1
jax: 0.10.0
libtpu: 0.0.40
codegen_flags: <defaults>
</compile_context>

<pallas_src>
import functools

import jax
import jax.numpy as jnp
from jax import lax
from jax.experimental import pallas as pl
from jax.experimental.pallas import tpu as pltpu

LN_EPS = 1e-5

# Row indices inside the packed (6, Dq) parameter-vector slab.
_BO, _G1, _B1, _BF2, _G2, _B2 = range(6)


# ------------------------------ Pallas kernel ------------------------------ #

def _layernorm(x, g, b, eps=LN_EPS):
    mu = jnp.mean(x, axis=-1, keepdims=True)
    xc = x - mu
    var = jnp.mean(xc * xc, axis=-1, keepdims=True)
    return xc * lax.rsqrt(var + eps) * g + b


def _transformer_kernel(x1_ref, x2_ref, x3_ref,
                        wq_ref, wk_ref, wo_ref, mask_ref,
                        vec_ref, bf1_ref, wf1_ref, wf2_ref,
                        o_ref, *, heads, rows):
    f32 = jnp.float32
    x1 = x1_ref[...].astype(f32)          # (B*N, Dq)
    x2 = x2_ref[...].astype(f32)          # (B*N, Dkv)
    x3 = x3_ref[...].astype(f32)          # (B*N, Dkv)

    # Per-head QKV projections on the full slab; heads packed along sublanes.
    q_parts, k_parts, v_parts = [], [], []
    for h in range(heads):
        q_parts.append(jnp.dot(x1, wq_ref[h], preferred_element_type=f32))
        k_parts.append(jnp.dot(x2, wk_ref[h], preferred_element_type=f32))
        v_parts.append(jnp.dot(x3, wk_ref[h], preferred_element_type=f32))  # v uses to_k weights
    qp = jnp.concatenate(q_parts, axis=0)  # (heads*B*N, dh)
    kp = jnp.concatenate(k_parts, axis=0)
    vp = jnp.concatenate(v_parts, axis=0)

    # Fused attention: one dots matmul + one P@V matmul across heads & batches.
    dots = lax.dot_general(qp, kp, (((1,), (1,)), ((), ())),
                           preferred_element_type=f32)         # (HBN, HBN)
    dots = dots + mask_ref[...]           # block-diagonal mask BEFORE row-max
    dots = dots - jnp.max(dots, axis=-1, keepdims=True)
    e = jnp.exp(dots)
    p = e * pl.reciprocal(jnp.sum(e, axis=-1, keepdims=True), approx=True)
    pv = jnp.dot(p, vp, preferred_element_type=f32)            # (HBN, dh)

    # Output projection accumulated per head (sublane-aligned row blocks).
    acc = None
    for h in range(heads):
        blk = pv[h * rows:(h + 1) * rows, :]                   # (B*N, dh)
        c = jnp.dot(blk, wo_ref[h], preferred_element_type=f32)
        acc = c if acc is None else acc + c
    proj = acc + vec_ref[_BO:_BO + 1, :]                       # to_out bias

    # Residual + LayerNorm1.
    y = _layernorm(proj + x1, vec_ref[_G1:_G1 + 1, :], vec_ref[_B1:_B1 + 1, :])

    # FeedForward: Linear -> ReLU -> Linear (dropout = identity).
    hdn = jnp.dot(y, wf1_ref[...], preferred_element_type=f32) + bf1_ref[...]
    hdn = jnp.maximum(hdn, 0.0)
    ff = jnp.dot(hdn, wf2_ref[...], preferred_element_type=f32) + vec_ref[_BF2:_BF2 + 1, :]

    # Residual + LayerNorm2.
    z = _layernorm(ff + y, vec_ref[_G2:_G2 + 1, :], vec_ref[_B2:_B2 + 1, :])
    o_ref[...] = z.astype(o_ref.dtype)


# ------------------------------- JAX wrapper -------------------------------- #

def transformer_forward(x1, x2, x3, params, heads):
    B, N, Dq = x1.shape
    Dkv = x2.shape[-1]
    A = params["wq"].shape[0]             # PyTorch Linear layout: (out, in)
    assert A % heads == 0
    dh = A // heads
    H = params["wf1"].shape[0]
    f32 = jnp.float32
    BN = B * N

    scale = dh ** -0.5
    # One-time weight transforms (constant-folded under jit); head-major layout.
    wq_h = (params["wq"].T * scale).astype(f32).reshape(Dq, heads, dh).transpose(1, 0, 2)  # (heads, Dq, dh)
    wk_h = params["wk"].T.astype(f32).reshape(Dkv, heads, dh).transpose(1, 0, 2)           # (heads, Dkv, dh)
    wo_h = params["wo"].T.astype(f32).reshape(heads, dh, Dq)                               # (heads, dh, Dq)
    wf1 = params["wf1"].T.astype(f32)                                                      # (Dq, H)
    wf2 = params["wf2"].T.astype(f32)                                                      # (H, Dq)
    bf1 = params["bf1"].reshape(1, H).astype(f32)

    # Pack the six (Dq,) vectors into one slab: [bo, g1, be1, bf2, g2, be2].
    vecs = jnp.stack([params["bo"], params["g1"], params["be1"],
                      params["bf2"], params["g2"], params["be2"]], axis=0).astype(f32)     # (6, Dq)

    # Block-diagonal attention mask: valid iff same head AND same batch.
    hbn = heads * BN
    idx = jnp.arange(hbn)
    row_head = idx // BN
    row_batch = (idx // N) % B
    same = (row_head[:, None] == row_head[None, :]) & (row_batch[:, None] == row_batch[None, :])
    mask = jnp.where(same, 0.0, -1e30).astype(f32)                                         # (hbn, hbn)

    x1f = x1.reshape(BN, Dq).astype(f32)
    x2f = x2.reshape(BN, Dkv).astype(f32)
    x3f = x3.reshape(BN, Dkv).astype(f32)

    kernel = functools.partial(_transformer_kernel, heads=heads, rows=BN)
    vmem = pltpu.MemorySpace.VMEM

    out_flat = pl.pallas_call(
        kernel,
        out_shape=jax.ShapeDtypeStruct((BN, Dq), x1.dtype),
        in_specs=[pl.BlockSpec(memory_space=vmem)] * 11,
        out_specs=pl.BlockSpec(memory_space=vmem),
    )(x1f, x2f, x3f, wq_h, wk_h, wo_h, mask, vecs, bf1, wf1, wf2)

    return out_flat.reshape(B, N, Dq)


# --------------------------- pure-JAX reference ----------------------------- #

def _ref_forward(x1, x2, x3, p, heads):
    A = p["wq"].shape[0]
    dh = A // heads
    scale = dh ** -0.5

    q = x1 @ p["wq"].T
    k = x2 @ p["wk"].T
    v = x3 @ p["wk"].T                    # matches PyTorch: v = self.to_k(x3)
    B, N, _ = q.shape

    def split(t):
        return t.reshape(B, N, heads, dh).transpose(0, 2, 1, 3)

    qh, kh, vh = split(q), split(k), split(v)
    dots = jnp.einsum("bhnd,bhmd->bhnm", qh, kh) * scale
    attn = jax.nn.softmax(dots, axis=-1)
    out = jnp.einsum("bhnm,bhmd->bhnd", attn, vh)
    out = out.transpose(0, 2, 1, 3).reshape(B, N, A)
    out = out @ p["wo"].T + p["bo"]

    def ln(x, g, b):
        mu = x.mean(-1, keepdims=True)
        var = ((x - mu) ** 2).mean(-1, keepdims=True)
        return (x - mu) / jnp.sqrt(var + LN_EPS) * g + b

    y = ln(out + x1, p["g1"], p["be1"])
    h = jax.nn.relu(y @ p["wf1"].T + p["bf1"])
    ff = h @ p["wf2"].T + p["bf2"]
    return ln(ff + y, p["g2"], p["be2"])


# ---------------------------------- main ------------------------------------ #

def _make_params(key, dim_q, dim_kv, att_dim, hidden):
    ks = jax.random.split(key, 16)
    f32 = jnp.float32

    def nrm(k, shape, scl=0.1):
        return (scl * jax.random.normal(k, shape)).astype(f32)

    return {
        # PyTorch nn.Linear layout: weight (out_features, in_features)
        "wq": nrm(ks[0], (att_dim, dim_q)),       # to_q (bias=False)
        "wk": nrm(ks[1], (att_dim, dim_kv)),      # to_k (bias=False)
        "wv": nrm(ks[2], (att_dim, dim_kv)),      # to_v (UNUSED by the forward pass)
        "wo": nrm(ks[3], (dim_q, att_dim)),       # to_out[0]
        "bo": nrm(ks[4], (dim_q,)),
        "g1": 1.0 + nrm(ks[5], (dim_q,)),  "be1": nrm(ks[6], (dim_q,)),
        "wf1": nrm(ks[7], (hidden, dim_q)), "bf1": nrm(ks[8], (hidden,)),
        "wf2": nrm(ks[9], (dim_q, hidden)), "bf2": nrm(ks[10], (dim_q,)),
        "g2": 1.0 + nrm(ks[11], (dim_q,)), "be2": nrm(ks[12], (dim_q,)),
    }


if __name__ == "__main__":
    B, N = 2, 8
    DIM_Q = 32
    DIM_KV = 32
    HEADS = 4
    ATT_DIM = 32
    HIDDEN = 64

    key = jax.random.PRNGKey(0)
    kx1, kx2, kx3, kp = jax.random.split(key, 4)
    x1 = jax.random.normal(kx1, (B, N, DIM_Q), dtype=jnp.float32)
    x2 = jax.random.normal(kx2, (B, N, DIM_KV), dtype=jnp.float32)
    x3 = jax.random.normal(kx3, (B, N, DIM_KV), dtype=jnp.float32)
    params = _make_params(kp, DIM_Q, DIM_KV, ATT_DIM, HIDDEN)

    fwd = jax.jit(functools.partial(transformer_forward, heads=HEADS))
    out = jax.block_until_ready(fwd(x1, x2, x3, params))

    ref = _ref_forward(x1, x2, x3, params, HEADS)
    assert out.shape == (B, N, DIM_Q)
    assert jnp.allclose(out, ref, rtol=2e-3, atol=2e-3), "mismatch vs JAX reference"

    print("KERNEL_OK")
</pallas_src>

<mosaic_0001>
module attributes {stable_mosaic.version = 11 : i64} {
  func.func @_transformer_kernel(%arg0: memref<16x32xf32, #tpu.memory_space<vmem>>, %arg1: memref<16x32xf32, #tpu.memory_space<vmem>>, %arg2: memref<16x32xf32, #tpu.memory_space<vmem>>, %arg3: memref<4x32x8xf32, #tpu.memory_space<vmem>>, %arg4: memref<4x32x8xf32, #tpu.memory_space<vmem>>, %arg5: memref<4x8x32xf32, #tpu.memory_space<vmem>>, %arg6: memref<64x64xf32, #tpu.memory_space<vmem>>, %arg7: memref<6x32xf32, #tpu.memory_space<vmem>>, %arg8: memref<1x64xf32, #tpu.memory_space<vmem>>, %arg9: memref<32x64xf32, #tpu.memory_space<vmem>>, %arg10: memref<64x32xf32, #tpu.memory_space<vmem>>, %arg11: memref<16x32xf32, #tpu.memory_space<vmem>>) attributes {dimension_semantics = [], scalar_prefetch = 0 : i64, scratch_operands = 0 : i64, tpu.core_type = #tpu.core_type<tc>} {
    %c0 = arith.constant 0 : index
    %c0_0 = arith.constant 0 : index
    %0 = vector.load %arg0[%c0, %c0_0] : memref<16x32xf32, #tpu.memory_space<vmem>>, vector<16x32xf32>
    %c0_1 = arith.constant 0 : index
    %c0_2 = arith.constant 0 : index
    %1 = vector.load %arg1[%c0_1, %c0_2] : memref<16x32xf32, #tpu.memory_space<vmem>>, vector<16x32xf32>
    %c0_3 = arith.constant 0 : index
    %c0_4 = arith.constant 0 : index
    %2 = vector.load %arg2[%c0_3, %c0_4] : memref<16x32xf32, #tpu.memory_space<vmem>>, vector<16x32xf32>
    %c0_5 = arith.constant 0 : index
    %c0_6 = arith.constant 0 : index
    %c0_7 = arith.constant 0 : index
    %3 = vector.load %arg3[%c0_5, %c0_6, %c0_7] : memref<4x32x8xf32, #tpu.memory_space<vmem>>, vector<1x32x8xf32>
    %4 = vector.shape_cast %3 : vector<1x32x8xf32> to vector<32x8xf32>
    %cst = arith.constant dense<0.000000e+00> : vector<16x8xf32>
    %5 = tpu.matmul %0, %4, %cst {dimension_numbers = #tpu.dot_dimension_numbers<[1], [0], [0], [1], [0, 0, 1, 1], [], []>} : vector<16x32xf32>, vector<32x8xf32>, vector<16x8xf32> -> vector<16x8xf32>
    %c0_8 = arith.constant 0 : index
    %c0_9 = arith.constant 0 : index
    %c0_10 = arith.constant 0 : index
    %6 = vector.load %arg4[%c0_8, %c0_9, %c0_10] : memref<4x32x8xf32, #tpu.memory_space<vmem>>, vector<1x32x8xf32>
    %7 = vector.shape_cast %6 : vector<1x32x8xf32> to vector<32x8xf32>
    %cst_11 = arith.constant dense<0.000000e+00> : vector<16x8xf32>
    %8 = tpu.matmul %1, %7, %cst_11 {dimension_numbers = #tpu.dot_dimension_numbers<[1], [0], [0], [1], [0, 0, 1, 1], [], []>} : vector<16x32xf32>, vector<32x8xf32>, vector<16x8xf32> -> vector<16x8xf32>
    %c0_12 = arith.constant 0 : index
    %c0_13 = arith.constant 0 : index
    %c0_14 = arith.constant 0 : index
    %9 = vector.load %arg4[%c0_12, %c0_13, %c0_14] : memref<4x32x8xf32, #tpu.memory_space<vmem>>, vector<1x32x8xf32>
    %10 = vector.shape_cast %9 : vector<1x32x8xf32> to vector<32x8xf32>
    %cst_15 = arith.constant dense<0.000000e+00> : vector<16x8xf32>
    %11 = tpu.matmul %2, %10, %cst_15 {dimension_numbers = #tpu.dot_dimension_numbers<[1], [0], [0], [1], [0, 0, 1, 1], [], []>} : vector<16x32xf32>, vector<32x8xf32>, vector<16x8xf32> -> vector<16x8xf32>
    %c1 = arith.constant 1 : index
    %c0_16 = arith.constant 0 : index
    %c0_17 = arith.constant 0 : index
    %12 = vector.load %arg3[%c1, %c0_16, %c0_17] : memref<4x32x8xf32, #tpu.memory_space<vmem>>, vector<1x32x8xf32>
    %13 = vector.shape_cast %12 : vector<1x32x8xf32> to vector<32x8xf32>
    %cst_18 = arith.constant dense<0.000000e+00> : vector<16x8xf32>
    %14 = tpu.matmul %0, %13, %cst_18 {dimension_numbers = #tpu.dot_dimension_numbers<[1], [0], [0], [1], [0, 0, 1, 1], [], []>} : vector<16x32xf32>, vector<32x8xf32>, vector<16x8xf32> -> vector<16x8xf32>
    %c1_19 = arith.constant 1 : index
    %c0_20 = arith.constant 0 : index
    %c0_21 = arith.constant 0 : index
    %15 = vector.load %arg4[%c1_19, %c0_20, %c0_21] : memref<4x32x8xf32, #tpu.memory_space<vmem>>, vector<1x32x8xf32>
    %16 = vector.shape_cast %15 : vector<1x32x8xf32> to vector<32x8xf32>
    %cst_22 = arith.constant dense<0.000000e+00> : vector<16x8xf32>
    %17 = tpu.matmul %1, %16, %cst_22 {dimension_numbers = #tpu.dot_dimension_numbers<[1], [0], [0], [1], [0, 0, 1, 1], [], []>} : vector<16x32xf32>, vector<32x8xf32>, vector<16x8xf32> -> vector<16x8xf32>
    %c1_23 = arith.constant 1 : index
    %c0_24 = arith.constant 0 : index
    %c0_25 = arith.constant 0 : index
    %18 = vector.load %arg4[%c1_23, %c0_24, %c0_25] : memref<4x32x8xf32, #tpu.memory_space<vmem>>, vector<1x32x8xf32>
    %19 = vector.shape_cast %18 : vector<1x32x8xf32> to vector<32x8xf32>
    %cst_26 = arith.constant dense<0.000000e+00> : vector<16x8xf32>
    %20 = tpu.matmul %2, %19, %cst_26 {dimension_numbers = #tpu.dot_dimension_numbers<[1], [0], [0], [1], [0, 0, 1, 1], [], []>} : vector<16x32xf32>, vector<32x8xf32>, vector<16x8xf32> -> vector<16x8xf32>
    %c2 = arith.constant 2 : index
    %c0_27 = arith.constant 0 : index
    %c0_28 = arith.constant 0 : index
    %21 = vector.load %arg3[%c2, %c0_27, %c0_28] : memref<4x32x8xf32, #tpu.memory_space<vmem>>, vector<1x32x8xf32>
    %22 = vector.shape_cast %21 : vector<1x32x8xf32> to vector<32x8xf32>
    %cst_29 = arith.constant dense<0.000000e+00> : vector<16x8xf32>
    %23 = tpu.matmul %0, %22, %cst_29 {dimension_numbers = #tpu.dot_dimension_numbers<[1], [0], [0], [1], [0, 0, 1, 1], [], []>} : vector<16x32xf32>, vector<32x8xf32>, vector<16x8xf32> -> vector<16x8xf32>
    %c2_30 = arith.constant 2 : index
    %c0_31 = arith.constant 0 : index
    %c0_32 = arith.constant 0 : index
    %24 = vector.load %arg4[%c2_30, %c0_31, %c0_32] : memref<4x32x8xf32, #tpu.memory_space<vmem>>, vector<1x32x8xf32>
    %25 = vector.shape_cast %24 : vector<1x32x8xf32> to vector<32x8xf32>
    %cst_33 = arith.constant dense<0.000000e+00> : vector<16x8xf32>
    %26 = tpu.matmul %1, %25, %cst_33 {dimension_numbers = #tpu.dot_dimension_numbers<[1], [0], [0], [1], [0, 0, 1, 1], [], []>} : vector<16x32xf32>, vector<32x8xf32>, vector<16x8xf32> -> vector<16x8xf32>
    %c2_34 = arith.constant 2 : index
    %c0_35 = arith.constant 0 : index
    %c0_36 = arith.constant 0 : index
    %27 = vector.load %arg4[%c2_34, %c0_35, %c0_36] : memref<4x32x8xf32, #tpu.memory_space<vmem>>, vector<1x32x8xf32>
    %28 = vector.shape_cast %27 : vector<1x32x8xf32> to vector<32x8xf32>
    %cst_37 = arith.constant dense<0.000000e+00> : vector<16x8xf32>
    %29 = tpu.matmul %2, %28, %cst_37 {dimension_numbers = #tpu.dot_dimension_numbers<[1], [0], [0], [1], [0, 0, 1, 1], [], []>} : vector<16x32xf32>, vector<32x8xf32>, vector<16x8xf32> -> vector<16x8xf32>
    %c3 = arith.constant 3 : index
    %c0_38 = arith.constant 0 : index
    %c0_39 = arith.constant 0 : index
    %30 = vector.load %arg3[%c3, %c0_38, %c0_39] : memref<4x32x8xf32, #tpu.memory_space<vmem>>, vector<1x32x8xf32>
    %31 = vector.shape_cast %30 : vector<1x32x8xf32> to vector<32x8xf32>
    %cst_40 = arith.constant dense<0.000000e+00> : vector<16x8xf32>
    %32 = tpu.matmul %0, %31, %cst_40 {dimension_numbers = #tpu.dot_dimension_numbers<[1], [0], [0], [1], [0, 0, 1, 1], [], []>} : vector<16x32xf32>, vector<32x8xf32>, vector<16x8xf32> -> vector<16x8xf32>
    %c3_41 = arith.constant 3 : index
    %c0_42 = arith.constant 0 : index
    %c0_43 = arith.constant 0 : index
    %33 = vector.load %arg4[%c3_41, %c0_42, %c0_43] : memref<4x32x8xf32, #tpu.memory_space<vmem>>, vector<1x32x8xf32>
    %34 = vector.shape_cast %33 : vector<1x32x8xf32> to vector<32x8xf32>
    %cst_44 = arith.constant dense<0.000000e+00> : vector<16x8xf32>
    %35 = tpu.matmul %1, %34, %cst_44 {dimension_numbers = #tpu.dot_dimension_numbers<[1], [0], [0], [1], [0, 0, 1, 1], [], []>} : vector<16x32xf32>, vector<32x8xf32>, vector<16x8xf32> -> vector<16x8xf32>
    %c3_45 = arith.constant 3 : index
    %c0_46 = arith.constant 0 : index
    %c0_47 = arith.constant 0 : index
    %36 = vector.load %arg4[%c3_45, %c0_46, %c0_47] : memref<4x32x8xf32, #tpu.memory_space<vmem>>, vector<1x32x8xf32>
    %37 = vector.shape_cast %36 : vector<1x32x8xf32> to vector<32x8xf32>
    %cst_48 = arith.constant dense<0.000000e+00> : vector<16x8xf32>
    %38 = tpu.matmul %2, %37, %cst_48 {dimension_numbers = #tpu.dot_dimension_numbers<[1], [0], [0], [1], [0, 0, 1, 1], [], []>} : vector<16x32xf32>, vector<32x8xf32>, vector<16x8xf32> -> vector<16x8xf32>
    %39 = tpu.concatenate %5, %14, %23, %32 in 0 : vector<16x8xf32>, vector<16x8xf32>, vector<16x8xf32>, vector<16x8xf32> -> vector<64x8xf32>
    %40 = tpu.concatenate %8, %17, %26, %35 in 0 : vector<16x8xf32>, vector<16x8xf32>, vector<16x8xf32>, vector<16x8xf32> -> vector<64x8xf32>
    %41 = tpu.concatenate %11, %20, %29, %38 in 0 : vector<16x8xf32>, vector<16x8xf32>, vector<16x8xf32>, vector<16x8xf32> -> vector<64x8xf32>
    %cst_49 = arith.constant dense<0.000000e+00> : vector<64x64xf32>
    %42 = tpu.matmul %39, %40, %cst_49 {dimension_numbers = #tpu.dot_dimension_numbers<[1], [1], [0], [0], [0, 0, 1, 0], [], []>} : vector<64x8xf32>, vector<64x8xf32>, vector<64x64xf32> -> vector<64x64xf32>
    %c0_50 = arith.constant 0 : index
    %c0_51 = arith.constant 0 : index
    %43 = vector.load %arg6[%c0_50, %c0_51] : memref<64x64xf32, #tpu.memory_space<vmem>>, vector<64x64xf32>
    %44 = arith.addf %42, %43 : vector<64x64xf32>
    %cst_52 = arith.constant dense<0xFF800000> : vector<64xf32>
    %45 = vector.multi_reduction <maximumf>, %44, %cst_52 [1] : vector<64x64xf32> to vector<64xf32>
    %46 = vector.shape_cast %45 : vector<64xf32> to vector<64x1xf32>
    %47 = vector.broadcast %46 : vector<64x1xf32> to vector<64x64xf32>
    %48 = arith.subf %44, %47 : vector<64x64xf32>
    %49 = math.exp %48 : vector<64x64xf32>
    %cst_53 = arith.constant dense<0.000000e+00> : vector<64xf32>
    %50 = vector.multi_reduction <add>, %49, %cst_53 [1] : vector<64x64xf32> to vector<64xf32>
    %51 = vector.shape_cast %50 : vector<64xf32> to vector<64x1xf32>
    %52 = tpu.reciprocal %51 {approx = true} : vector<64x1xf32> -> vector<64x1xf32>
    %53 = vector.broadcast %52 : vector<64x1xf32> to vector<64x64xf32>
    %54 = arith.mulf %49, %53 : vector<64x64xf32>
    %cst_54 = arith.constant dense<0.000000e+00> : vector<64x8xf32>
    %55 = tpu.matmul %54, %41, %cst_54 {dimension_numbers = #tpu.dot_dimension_numbers<[1], [0], [0], [1], [0, 0, 1, 1], [], []>} : vector<64x64xf32>, vector<64x8xf32>, vector<64x8xf32> -> vector<64x8xf32>
    %56 = vector.extract_strided_slice %55 {offsets = [0, 0], sizes = [16, 8], strides = [1, 1]} : vector<64x8xf32> to vector<16x8xf32>
    %c0_55 = arith.constant 0 : index
    %c0_56 = arith.constant 0 : index
    %c0_57 = arith.constant 0 : index
    %57 = vector.load %arg5[%c0_55, %c0_56, %c0_57] : memref<4x8x32xf32, #tpu.memory_space<vmem>>, vector<1x8x32xf32>
    %58 = vector.shape_cast %57 : vector<1x8x32xf32> to vector<8x32xf32>
    %cst_58 = arith.constant dense<0.000000e+00> : vector<16x32xf32>
    %59 = tpu.matmul %56, %58, %cst_58 {dimension_numbers = #tpu.dot_dimension_numbers<[1], [0], [0], [1], [0, 0, 1, 1], [], []>} : vector<16x8xf32>, vector<8x32xf32>, vector<16x32xf32> -> vector<16x32xf32>
    %60 = vector.extract_strided_slice %55 {offsets = [16, 0], sizes = [16, 8], strides = [1, 1]} : vector<64x8xf32> to vector<16x8xf32>
    %c1_59 = arith.constant 1 : index
    %c0_60 = arith.constant 0 : index
    %c0_61 = arith.constant 0 : index
    %61 = vector.load %arg5[%c1_59, %c0_60, %c0_61] : memref<4x8x32xf32, #tpu.memory_space<vmem>>, vector<1x8x32xf32>
    %62 = vector.shape_cast %61 : vector<1x8x32xf32> to vector<8x32xf32>
    %cst_62 = arith.constant dense<0.000000e+00> : vector<16x32xf32>
    %63 = tpu.matmul %60, %62, %cst_62 {dimension_numbers = #tpu.dot_dimension_numbers<[1], [0], [0], [1], [0, 0, 1, 1], [], []>} : vector<16x8xf32>, vector<8x32xf32>, vector<16x32xf32> -> vector<16x32xf32>
    %64 = arith.addf %59, %63 : vector<16x32xf32>
    %65 = vector.extract_strided_slice %55 {offsets = [32, 0], sizes = [16, 8], strides = [1, 1]} : vector<64x8xf32> to vector<16x8xf32>
    %c2_63 = arith.constant 2 : index
    %c0_64 = arith.constant 0 : index
    %c0_65 = arith.constant 0 : index
    %66 = vector.load %arg5[%c2_63, %c0_64, %c0_65] : memref<4x8x32xf32, #tpu.memory_space<vmem>>, vector<1x8x32xf32>
    %67 = vector.shape_cast %66 : vector<1x8x32xf32> to vector<8x32xf32>
    %cst_66 = arith.constant dense<0.000000e+00> : vector<16x32xf32>
    %68 = tpu.matmul %65, %67, %cst_66 {dimension_numbers = #tpu.dot_dimension_numbers<[1], [0], [0], [1], [0, 0, 1, 1], [], []>} : vector<16x8xf32>, vector<8x32xf32>, vector<16x32xf32> -> vector<16x32xf32>
    %69 = arith.addf %64, %68 : vector<16x32xf32>
    %70 = vector.extract_strided_slice %55 {offsets = [48, 0], sizes = [16, 8], strides = [1, 1]} : vector<64x8xf32> to vector<16x8xf32>
    %c3_67 = arith.constant 3 : index
    %c0_68 = arith.constant 0 : index
    %c0_69 = arith.constant 0 : index
    %71 = vector.load %arg5[%c3_67, %c0_68, %c0_69] : memref<4x8x32xf32, #tpu.memory_space<vmem>>, vector<1x8x32xf32>
    %72 = vector.shape_cast %71 : vector<1x8x32xf32> to vector<8x32xf32>
    %cst_70 = arith.constant dense<0.000000e+00> : vector<16x32xf32>
    %73 = tpu.matmul %70, %72, %cst_70 {dimension_numbers = #tpu.dot_dimension_numbers<[1], [0], [0], [1], [0, 0, 1, 1], [], []>} : vector<16x8xf32>, vector<8x32xf32>, vector<16x32xf32> -> vector<16x32xf32>
    %74 = arith.addf %69, %73 : vector<16x32xf32>
    %c0_71 = arith.constant 0 : index
    %c0_72 = arith.constant 0 : index
    %75 = vector.load %arg7[%c0_71, %c0_72] : memref<6x32xf32, #tpu.memory_space<vmem>>, vector<1x32xf32>
    %76 = vector.broadcast %75 : vector<1x32xf32> to vector<16x32xf32>
    %77 = arith.addf %74, %76 : vector<16x32xf32>
    %78 = arith.addf %77, %0 : vector<16x32xf32>
    %c1_73 = arith.constant 1 : index
    %c0_74 = arith.constant 0 : index
    %79 = vector.load %arg7[%c1_73, %c0_74] : memref<6x32xf32, #tpu.memory_space<vmem>>, vector<1x32xf32>
    %c2_75 = arith.constant 2 : index
    %c0_76 = arith.constant 0 : index
    %80 = vector.load %arg7[%c2_75, %c0_76] : memref<6x32xf32, #tpu.memory_space<vmem>>, vector<1x32xf32>
    %cst_77 = arith.constant dense<0.000000e+00> : vector<16xf32>
    %81 = vector.multi_reduction <add>, %78, %cst_77 [1] : vector<16x32xf32> to vector<16xf32>
    %82 = vector.shape_cast %81 : vector<16xf32> to vector<16x1xf32>
    %cst_78 = arith.constant 3.200000e+01 : f32
    %83 = vector.broadcast %cst_78 : f32 to vector<16x1xf32>
    %84 = arith.divf %82, %83 : vector<16x1xf32>
    %85 = vector.broadcast %84 : vector<16x1xf32> to vector<16x32xf32>
    %86 = arith.subf %78, %85 : vector<16x32xf32>
    %87 = arith.mulf %86, %86 : vector<16x32xf32>
    %cst_79 = arith.constant dense<0.000000e+00> : vector<16xf32>
    %88 = vector.multi_reduction <add>, %87, %cst_79 [1] : vector<16x32xf32> to vector<16xf32>
    %89 = vector.shape_cast %88 : vector<16xf32> to vector<16x1xf32>
    %cst_80 = arith.constant 3.200000e+01 : f32
    %90 = vector.broadcast %cst_80 : f32 to vector<16x1xf32>
    %91 = arith.divf %89, %90 : vector<16x1xf32>
    %cst_81 = arith.constant 9.99999974E-6 : f32
    %92 = vector.broadcast %cst_81 : f32 to vector<16x1xf32>
    %93 = arith.addf %91, %92 : vector<16x1xf32>
    %94 = math.rsqrt %93 : vector<16x1xf32>
    %95 = vector.broadcast %94 : vector<16x1xf32> to vector<16x32xf32>
    %96 = arith.mulf %86, %95 : vector<16x32xf32>
    %97 = vector.broadcast %79 : vector<1x32xf32> to vector<16x32xf32>
    %98 = arith.mulf %96, %97 : vector<16x32xf32>
    %99 = vector.broadcast %80 : vector<1x32xf32> to vector<16x32xf32>
    %100 = arith.addf %98, %99 : vector<16x32xf32>
    %c0_82 = arith.constant 0 : index
    %c0_83 = arith.constant 0 : index
    %101 = vector.load %arg9[%c0_82, %c0_83] : memref<32x64xf32, #tpu.memory_space<vmem>>, vector<32x64xf32>
    %cst_84 = arith.constant dense<0.000000e+00> : vector<16x64xf32>
    %102 = tpu.matmul %100, %101, %cst_84 {dimension_numbers = #tpu.dot_dimension_numbers<[1], [0], [0], [1], [0, 0, 1, 1], [], []>} : vector<16x32xf32>, vector<32x64xf32>, vector<16x64xf32> -> vector<16x64xf32>
    %c0_85 = arith.constant 0 : index
    %c0_86 = arith.constant 0 : index
    %103 = vector.load %arg8[%c0_85, %c0_86] : memref<1x64xf32, #tpu.memory_space<vmem>>, vector<1x64xf32>
    %104 = vector.broadcast %103 : vector<1x64xf32> to vector<16x64xf32>
    %105 = arith.addf %102, %104 : vector<16x64xf32>
    %cst_87 = arith.constant 0.000000e+00 : f32
    %106 = vector.broadcast %cst_87 : f32 to vector<16x64xf32>
    %107 = arith.maximumf %105, %106 : vector<16x64xf32>
    %c0_88 = arith.constant 0 : index
    %c0_89 = arith.constant 0 : index
    %108 = vector.load %arg10[%c0_88, %c0_89] : memref<64x32xf32, #tpu.memory_space<vmem>>, vector<64x32xf32>
    %cst_90 = arith.constant dense<0.000000e+00> : vector<16x32xf32>
    %109 = tpu.matmul %107, %108, %cst_90 {dimension_numbers = #tpu.dot_dimension_numbers<[1], [0], [0], [1], [0, 0, 1, 1], [], []>} : vector<16x64xf32>, vector<64x32xf32>, vector<16x32xf32> -> vector<16x32xf32>
    %c3_91 = arith.constant 3 : index
    %c0_92 = arith.constant 0 : index
    %110 = vector.load %arg7[%c3_91, %c0_92] : memref<6x32xf32, #tpu.memory_space<vmem>>, vector<1x32xf32>
    %111 = vector.broadcast %110 : vector<1x32xf32> to vector<16x32xf32>
    %112 = arith.addf %109, %111 : vector<16x32xf32>
    %113 = arith.addf %112, %100 : vector<16x32xf32>
    %c4 = arith.constant 4 : index
    %c0_93 = arith.constant 0 : index
    %114 = vector.load %arg7[%c4, %c0_93] : memref<6x32xf32, #tpu.memory_space<vmem>>, vector<1x32xf32>
    %c5 = arith.constant 5 : index
    %c0_94 = arith.constant 0 : index
    %115 = vector.load %arg7[%c5, %c0_94] : memref<6x32xf32, #tpu.memory_space<vmem>>, vector<1x32xf32>
    %cst_95 = arith.constant dense<0.000000e+00> : vector<16xf32>
    %116 = vector.multi_reduction <add>, %113, %cst_95 [1] : vector<16x32xf32> to vector<16xf32>
    %117 = vector.shape_cast %116 : vector<16xf32> to vector<16x1xf32>
    %cst_96 = arith.constant 3.200000e+01 : f32
    %118 = vector.broadcast %cst_96 : f32 to vector<16x1xf32>
    %119 = arith.divf %117, %118 : vector<16x1xf32>
    %120 = vector.broadcast %119 : vector<16x1xf32> to vector<16x32xf32>
    %121 = arith.subf %113, %120 : vector<16x32xf32>
    %122 = arith.mulf %121, %121 : vector<16x32xf32>
    %cst_97 = arith.constant dense<0.000000e+00> : vector<16xf32>
    %123 = vector.multi_reduction <add>, %122, %cst_97 [1] : vector<16x32xf32> to vector<16xf32>
    %124 = vector.shape_cast %123 : vector<16xf32> to vector<16x1xf32>
    %cst_98 = arith.constant 3.200000e+01 : f32
    %125 = vector.broadcast %cst_98 : f32 to vector<16x1xf32>
    %126 = arith.divf %124, %125 : vector<16x1xf32>
    %cst_99 = arith.constant 9.99999974E-6 : f32
    %127 = vector.broadcast %cst_99 : f32 to vector<16x1xf32>
    %128 = arith.addf %126, %127 : vector<16x1xf32>
    %129 = math.rsqrt %128 : vector<16x1xf32>
    %130 = vector.broadcast %129 : vector<16x1xf32> to vector<16x32xf32>
    %131 = arith.mulf %121, %130 : vector<16x32xf32>
    %132 = vector.broadcast %114 : vector<1x32xf32> to vector<16x32xf32>
    %133 = arith.mulf %131, %132 : vector<16x32xf32>
    %134 = vector.broadcast %115 : vector<1x32xf32> to vector<16x32xf32>
    %135 = arith.addf %133, %134 : vector<16x32xf32>
    %c0_100 = arith.constant 0 : index
    %c0_101 = arith.constant 0 : index
    %136 = vector.load %arg11[%c0_100, %c0_101] : memref<16x32xf32, #tpu.memory_space<vmem>>, vector<16x32xf32>
    tpu.vector_store %arg11[%c0_100, %c0_101], %135 {strides = array<i32>} : memref<16x32xf32, #tpu.memory_space<vmem>>, vector<16x32xf32>,
    return
  }
}

</mosaic_0001>

<llo_original>
// kernel: transformer_forward.1
$region0: #{transformer_forward.1}
  #allocation0 [shape = 'u32[]', space=smem, size = 0x4, offset = 0x4, fixed_abs, tag = 'smem constant byte address 0x4 - core index']
  #allocation1 [shape = 'u32[144,128]{1,0:T(1,128)}', space=vmem, size = 0x12000, scoped, tag = 'internal scratch']
  %s0 = inlined_call_operand.vmem [shape: f32[16,32], index: 0, kind: input, shape index: {}]
  %s1 = inlined_call_operand.vmem [shape: f32[16,32], index: 1, kind: input, shape index: {}]
  %s2 = inlined_call_operand.vmem [shape: f32[16,32], index: 2, kind: input, shape index: {}]
  %s3 = inlined_call_operand.vmem [shape: f32[4,32,8], index: 3, kind: input, shape index: {}]
  %s4 = inlined_call_operand.vmem [shape: f32[4,32,8], index: 4, kind: input, shape index: {}]
  %s5 = inlined_call_operand.vmem [shape: f32[4,8,32], index: 5, kind: input, shape index: {}]
  %s6 = inlined_call_operand.vmem [shape: f32[64,64], index: 6, kind: input, shape index: {}]
  %s7 = inlined_call_operand.vmem [shape: f32[6,32], index: 7, kind: input, shape index: {}]
  %s8 = inlined_call_operand.vmem [shape: f32[1,64], index: 8, kind: input, shape index: {}]
  %s9 = inlined_call_operand.vmem [shape: f32[32,64], index: 9, kind: input, shape index: {}]
  %s10 = inlined_call_operand.vmem [shape: f32[64,32], index: 10, kind: input, shape index: {}]
  %s11 = inlined_call_operand.hbm [shape: f32[16,32], index: 11, kind: output, shape index: {}]
  %s12 = sld [smem:[#allocation0]]
  $region54: #{transformer_forward.1} parent=0
    _
  %s14 = ssub.s32 1, %s12
  %s15 = scalar_select 0, %s14, %s12
  $region1: #{transformer_forward.1} parent=0
    #allocation2 [shape = 'u8[8192]{0}', space=vmem, size = 0x2000, scoped, tag = 'output window, operand 0, single buffered']
    #allocation3 [shape = 's32[1]{0}', space=sflag, size = 0x4, scoped, tag = 'scoped memory for transformer_forward.1']
    %16 = vsyncpa [#allocation3], 0
    // Predicated region
    $region2: #{transformer_forward.1} parent=1 // pred_check
      _
    $region3: #{transformer_forward.1} parent=1 // pred_check_branch
      %18 = sbr.rel (0) target = $region5
    $region4: #{transformer_forward.1} parent=1 // pred_region
      _
    $region5: #{transformer_forward.1} parent=1 // pred_fallthru
      _
    // Predicated region
    $region6: #{transformer_forward.1} parent=1 // pred_check
      _
    $region7: #{transformer_forward.1} parent=1 // pred_check_branch
      %20 = sbr.rel (0) target = $region9
    $region8: #{transformer_forward.1} parent=1 // pred_region
      _
    $region9: #{transformer_forward.1} parent=1 // pred_fallthru
      _
    // Predicated region
    $region10: #{transformer_forward.1} parent=1 // pred_check
      _
    $region11: #{transformer_forward.1} parent=1 // pred_check_branch
      %22 = sbr.rel (0) target = $region13
    $region12: #{transformer_forward.1} parent=1 // pred_region
      _
    $region13: #{transformer_forward.1} parent=1 // pred_fallthru
      _
    // Predicated region
    $region14: #{transformer_forward.1} parent=1 // pred_check
      _
    $region15: #{transformer_forward.1} parent=1 // pred_check_branch
      %24 = sbr.rel (0) target = $region17
    $region16: #{transformer_forward.1} parent=1 // pred_region
      _
    $region17: #{transformer_forward.1} parent=1 // pred_fallthru
      _
    // Predicated region
    $region18: #{transformer_forward.1} parent=1 // pred_check
      _
    $region19: #{transformer_forward.1} parent=1 // pred_check_branch
      %26 = sbr.rel (0) target = $region21
    $region20: #{transformer_forward.1} parent=1 // pred_region
      _
    $region21: #{transformer_forward.1} parent=1 // pred_fallthru
      _
    // Predicated region
    $region22: #{transformer_forward.1} parent=1 // pred_check
      _
    $region23: #{transformer_forward.1} parent=1 // pred_check_branch
      %28 = sbr.rel (0) target = $region25
    $region24: #{transformer_forward.1} parent=1 // pred_region
      _
    $region25: #{transformer_forward.1} parent=1 // pred_fallthru
      _
    // Predicated region
    $region26: #{transformer_forward.1} parent=1 // pred_check
      _
    $region27: #{transformer_forward.1} parent=1 // pred_check_branch
      %30 = sbr.rel (0) target = $region29
    $region28: #{transformer_forward.1} parent=1 // pred_region
      _
    $region29: #{transformer_forward.1} parent=1 // pred_fallthru
      _
    // Predicated region
    $region30: #{transformer_forward.1} parent=1 // pred_check
      _
    $region31: #{transformer_forward.1} parent=1 // pred_check_branch
      %32 = sbr.rel (0) target = $region33
    $region32: #{transformer_forward.1} parent=1 // pred_region
      _
    $region33: #{transformer_forward.1} parent=1 // pred_fallthru
      _
    // Predicated region
    $region34: #{transformer_forward.1} parent=1 // pred_check
      _
    $region35: #{transformer_forward.1} parent=1 // pred_check_branch
      %34 = sbr.rel (0) target = $region37
    $region36: #{transformer_forward.1} parent=1 // pred_region
      _
    $region37: #{transformer_forward.1} parent=1 // pred_fallthru
      _
    // Predicated region
    $region38: #{transformer_forward.1} parent=1 // pred_check
      _
    $region39: #{transformer_forward.1} parent=1 // pred_check_branch
      %36 = sbr.rel (0) target = $region41
    $region40: #{transformer_forward.1} parent=1 // pred_region
      _
    $region41: #{transformer_forward.1} parent=1 // pred_fallthru
      _
    // Predicated region
    $region42: #{transformer_forward.1} parent=1 // pred_check
      _
    $region43: #{transformer_forward.1} parent=1 // pred_check_branch
      %38 = sbr.rel (0) target = $region45
    $region44: #{transformer_forward.1} parent=1 // pred_region
      _
    $region45: #{transformer_forward.1} parent=1 // pred_fallthru
      _
    %v39 = vld [vmem:[%s0] sm:$0xff]
    %v40 = vld [vmem:[%s0 + $0x8] sm:$0xff]
    %v41 = vld [vmem:[%s1] sm:$0xff]
    %v42 = vld [vmem:[%s1 + $0x8] sm:$0xff]
    %v43 = vld [vmem:[%s2] sm:$0xff]
    %v44 = vld [vmem:[%s2 + $0x8] sm:$0xff]
    %v45 = vld [vmem:[%s3] sm:$0xff]
    %v46 = vld [vmem:[%s3 + $0x8] sm:$0xff]
    %v47 = vld [vmem:[%s3 + $0x10] sm:$0xff]
    %v48 = vld [vmem:[%s3 + $0x18] sm:$0xff]
    %vm49 = vcmask 261120
    %v51 = vsel %vm49, %v39, 0
    %v54 = vsel %vm49, %v40, 0
    %56 = vmatprep.subr.mxu0 0.0
    %57 = vmatpush1.msra.mxu0 0.0
    %58 = vmatprep.subr.mxu0 0.0
    %59 = vmatpush1.msra.mxu0 0.0
    %60 = vmatprep.subr.mxu0 0.0
    %61 = vmatpush1.msra.mxu0 0.0
    %62 = vmatprep.subr.mxu0 0.0
    %63 = vmatpush1.msra.mxu0 0.0
    %64 = vmatprep.subr.mxu0 0.0
    %65 = vmatpush1.msra.mxu0 0.0
    %66 = vmatprep.subr.mxu0 0.0
    %67 = vmatpush1.msra.mxu0 0.0
    %68 = vmatprep.subr.mxu0 0.0
    %69 = vmatpush1.msra.mxu0 0.0
    %70 = vmatprep.subr.mxu0 0.0
    %71 = vmatpush1.msra.mxu0 0.0
    %72 = vmatprep.subr.mxu0 0.0
    %73 = vmatpush1.msra.mxu0 0.0
    %74 = vmatprep.subr.mxu0 0.0
    %75 = vmatpush1.msra.mxu0 0.0
    %76 = vmatprep.subr.mxu0 0.0
    %77 = vmatpush1.msra.mxu0 0.0
    %78 = vmatprep.subr.mxu0 0.0
    %79 = vmatpush1.msra.mxu0 0.0
    %80 = vmatprep.subr.mxu0 0.0
    %81 = vmatpush1.msra.mxu0 %v48
    %82 = vmatprep.subr.mxu0 0.0
    %83 = vmatpush1.msra.mxu0 %v47
    %84 = vmatprep.subr.mxu0 0.0
    %85 = vmatpush1.msra.mxu0 %v46
    %86 = vmatprep.subr.mxu0 0.0
    %87 = vmatpush1.msra.mxu0 %v45
    %88 = vmatprep.subr.mxu0 0.0
    %89 = vmatpush2.msra.mxu0 0.0
    %90 = vmatprep.subr.mxu0 0.0
    %91 = vmatpush2.msra.mxu0 0.0
    %92 = vmatprep.subr.mxu0 0.0
    %93 = vmatpush2.msra.mxu0 0.0
    %94 = vmatprep.subr.mxu0 0.0
    %95 = vmatpush2.msra.mxu0 0.0
    %96 = vmatprep.subr.mxu0 0.0
    %97 = vmatpush2.msra.mxu0 0.0
    %98 = vmatprep.subr.mxu0 0.0
    %99 = vmatpush2.msra.mxu0 0.0
    %100 = vmatprep.subr.mxu0 0.0
    %101 = vmatpush2.msra.mxu0 0.0
    %102 = vmatprep.subr.mxu0 0.0
    %103 = vmatpush2.msra.mxu0 0.0
    %104 = vmatprep.subr.mxu0 0.0
    %105 = vmatpush2.msra.mxu0 0.0
    %106 = vmatprep.subr.mxu0 0.0
    %107 = vmatpush2.msra.mxu0 0.0
    %108 = vmatprep.subr.mxu0 0.0
    %109 = vmatpush2.msra.mxu0 0.0
    %110 = vmatprep.subr.mxu0 0.0
    %111 = vmatpush2.msra.mxu0 0.0
    %112 = vmatprep.subr.mxu0 0.0
    %113 = vmatpush2.msra.mxu0 0.0
    %114 = vmatprep.subr.mxu0 0.0
    %115 = vmatpush2.msra.mxu0 0.0
    %116 = vmatprep.subr.mxu0 0.0
    %117 = vmatpush2.msra.mxu0 0.0
    %118 = vmatprep.subr.mxu0 0.0
    %119 = vmatpush2.msra.mxu0 0.0
    %120 = vmatprep.mubr.f32.mxu0 0.0
    %121 = vmatmul.mubr.f32.gmra.mxu0 %v51
    %v122 = vpop.f32.mrf.mxu0
    %v123 = vadd.f32 0.0, %v122
    %v124 = vpop.f32.mrf.mxu0
    %125 = vmatprep.mubr.f32.mxu0 0.0
    %126 = vmatmul.mubr.f32.gmra.mxu0 %v54
    %v127 = vpop.f32.mrf.mxu0
    %v128 = vadd.f32 0.0, %v127
    %v129 = vpop.f32.mrf.mxu0
    %130 = vdwg.mxu0
    %v131 = vld [vmem:[%s4] sm:$0xff]
    %v132 = vld [vmem:[%s4 + $0x8] sm:$0xff]
    %v133 = vld [vmem:[%s4 + $0x10] sm:$0xff]
    %v134 = vld [vmem:[%s4 + $0x18] sm:$0xff]
    %v136 = vsel %vm49, %v41, 0
    %v139 = vsel %vm49, %v42, 0
    %141 = vmatprep.subr.mxu0 0.0
    %142 = vmatpush1.msra.mxu0 0.0
    %143 = vmatprep.subr.mxu0 0.0
    %144 = vmatpush1.msra.mxu0 0.0
    %145 = vmatprep.subr.mxu0 0.0
    %146 = vmatpush1.msra.mxu0 0.0
    %147 = vmatprep.subr.mxu0 0.0
    %148 = vmatpush1.msra.mxu0 0.0
    %149 = vmatprep.subr.mxu0 0.0
    %150 = vmatpush1.msra.mxu0 0.0
    %151 = vmatprep.subr.mxu0 0.0
    %152 = vmatpush1.msra.mxu0 0.0
    %153 = vmatprep.subr.mxu0 0.0
    %154 = vmatpush1.msra.mxu0 0.0
    %155 = vmatprep.subr.mxu0 0.0
    %156 = vmatpush1.msra.mxu0 0.0
    %157 = vmatprep.subr.mxu0 0.0
    %158 = vmatpush1.msra.mxu0 0.0
    %159 = vmatprep.subr.mxu0 0.0
    %160 = vmatpush1.msra.mxu0 0.0
    %161 = vmatprep.subr.mxu0 0.0
    %162 = vmatpush1.msra.mxu0 0.0
    %163 = vmatprep.subr.mxu0 0.0
    %164 = vmatpush1.msra.mxu0 0.0
    %165 = vmatprep.subr.mxu0 0.0
    %166 = vmatpush1.msra.mxu0 %v134
    %167 = vmatprep.subr.mxu0 0.0
    %168 = vmatpush1.msra.mxu0 %v133
    %169 = vmatprep.subr.mxu0 0.0
    %170 = vmatpush1.msra.mxu0 %v132
    %171 = vmatprep.subr.mxu0 0.0
    %172 = vmatpush1.msra.mxu0 %v131
    %173 = vmatprep.subr.mxu0 0.0
    %174 = vmatpush2.msra.mxu0 0.0
    %175 = vmatprep.subr.mxu0 0.0
    %176 = vmatpush2.msra.mxu0 0.0
    %177 = vmatprep.subr.mxu0 0.0
    %178 = vmatpush2.msra.mxu0 0.0
    %179 = vmatprep.subr.mxu0 0.0
    %180 = vmatpush2.msra.mxu0 0.0
    %181 = vmatprep.subr.mxu0 0.0
    %182 = vmatpush2.msra.mxu0 0.0
    %183 = vmatprep.subr.mxu0 0.0
    %184 = vmatpush2.msra.mxu0 0.0
    %185 = vmatprep.subr.mxu0 0.0
    %186 = vmatpush2.msra.mxu0 0.0
    %187 = vmatprep.subr.mxu0 0.0
    %188 = vmatpush2.msra.mxu0 0.0
    %189 = vmatprep.subr.mxu0 0.0
    %190 = vmatpush2.msra.mxu0 0.0
    %191 = vmatprep.subr.mxu0 0.0
    %192 = vmatpush2.msra.mxu0 0.0
    %193 = vmatprep.subr.mxu0 0.0
    %194 = vmatpush2.msra.mxu0 0.0
    %195 = vmatprep.subr.mxu0 0.0
    %196 = vmatpush2.msra.mxu0 0.0
    %197 = vmatprep.subr.mxu0 0.0
    %198 = vmatpush2.msra.mxu0 0.0
    %199 = vmatprep.subr.mxu0 0.0
    %200 = vmatpush2.msra.mxu0 0.0
    %201 = vmatprep.subr.mxu0 0.0
    %202 = vmatpush2.msra.mxu0 0.0
    %203 = vmatprep.subr.mxu0 0.0
    %204 = vmatpush2.msra.mxu0 0.0
    %205 = vmatprep.mubr.f32.mxu0 0.0
    %206 = vmatmul.mubr.f32.gmra.mxu0 %v136
    %v207 = vpop.f32.mrf.mxu0
    %v208 = vadd.f32 0.0, %v207
    %v209 = vpop.f32.mrf.mxu0
    %210 = vmatprep.mubr.f32.mxu0 0.0
    %211 = vmatmul.mubr.f32.gmra.mxu0 %v139
    %v212 = vpop.f32.mrf.mxu0
    %v213 = vadd.f32 0.0, %v212
    %v214 = vpop.f32.mrf.mxu0
    %215 = vdwg.mxu0
    %v217 = vsel %vm49, %v43, 0
    %v220 = vsel %vm49, %v44, 0
    %222 = vmatprep.subr.mxu0 0.0
    %223 = vmatpush1.msra.mxu0 0.0
    %224 = vmatprep.subr.mxu0 0.0
    %225 = vmatpush1.msra.mxu0 0.0
    %226 = vmatprep.subr.mxu0 0.0
    %227 = vmatpush1.msra.mxu0 0.0
    %228 = vmatprep.subr.mxu0 0.0
    %229 = vmatpush1.msra.mxu0 0.0
    %230 = vmatprep.subr.mxu0 0.0
    %231 = vmatpush1.msra.mxu0 0.0
    %232 = vmatprep.subr.mxu0 0.0
    %233 = vmatpush1.msra.mxu0 0.0
    %234 = vmatprep.subr.mxu0 0.0
    %235 = vmatpush1.msra.mxu0 0.0
    %236 = vmatprep.subr.mxu0 0.0
    %237 = vmatpush1.msra.mxu0 0.0
    %238 = vmatprep.subr.mxu0 0.0
    %239 = vmatpush1.msra.mxu0 0.0
    %240 = vmatprep.subr.mxu0 0.0
    %241 = vmatpush1.msra.mxu0 0.0
    %242 = vmatprep.subr.mxu0 0.0
    %243 = vmatpush1.msra.mxu0 0.0
    %244 = vmatprep.subr.mxu0 0.0
    %245 = vmatpush1.msra.mxu0 0.0
    %246 = vmatprep.subr.mxu0 0.0
    %247 = vmatpush1.msra.mxu0 %v134
    %248 = vmatprep.subr.mxu0 0.0
    %249 = vmatpush1.msra.mxu0 %v133
    %250 = vmatprep.subr.mxu0 0.0
    %251 = vmatpush1.msra.mxu0 %v132
    %252 = vmatprep.subr.mxu0 0.0
    %253 = vmatpush1.msra.mxu0 %v131
    %254 = vmatprep.subr.mxu0 0.0
    %255 = vmatpush2.msra.mxu0 0.0
    %256 = vmatprep.subr.mxu0 0.0
    %257 = vmatpush2.msra.mxu0 0.0
    %258 = vmatprep.subr.mxu0 0.0
    %259 = vmatpush2.msra.mxu0 0.0
    %260 = vmatprep.subr.mxu0 0.0
    %261 = vmatpush2.msra.mxu0 0.0
    %262 = vmatprep.subr.mxu0 0.0
    %263 = vmatpush2.msra.mxu0 0.0
    %264 = vmatprep.subr.mxu0 0.0
    %265 = vmatpush2.msra.mxu0 0.0
    %266 = vmatprep.subr.mxu0 0.0
    %267 = vmatpush2.msra.mxu0 0.0
    %268 = vmatprep.subr.mxu0 0.0
    %269 = vmatpush2.msra.mxu0 0.0
    %270 = vmatprep.subr.mxu0 0.0
    %271 = vmatpush2.msra.mxu0 0.0
    %272 = vmatprep.subr.mxu0 0.0
    %273 = vmatpush2.msra.mxu0 0.0
    %274 = vmatprep.subr.mxu0 0.0
    %275 = vmatpush2.msra.mxu0 0.0
    %276 = vmatprep.subr.mxu0 0.0
    %277 = vmatpush2.msra.mxu0 0.0
    %278 = vmatprep.subr.mxu0 0.0
    %279 = vmatpush2.msra.mxu0 0.0
    %280 = vmatprep.subr.mxu0 0.0
    %281 = vmatpush2.msra.mxu0 0.0
    %282 = vmatprep.subr.mxu0 0.0
    %283 = vmatpush2.msra.mxu0 0.0
    %284 = vmatprep.subr.mxu0 0.0
    %285 = vmatpush2.msra.mxu0 0.0
    %286 = vmatprep.mubr.f32.mxu0 0.0
    %287 = vmatmul.mubr.f32.gmra.mxu0 %v217
    %v288 = vpop.f32.mrf.mxu0
    %v289 = vadd.f32 0.0, %v288
    %v290 = vpop.f32.mrf.mxu0
    %291 = vmatprep.mubr.f32.mxu0 0.0
    %292 = vmatmul.mubr.f32.gmra.mxu0 %v220
    %v293 = vpop.f32.mrf.mxu0
    %v294 = vadd.f32 0.0, %v293
    %v295 = vpop.f32.mrf.mxu0
    %296 = vdwg.mxu0
    %s297 = scalar_lea.vmem %s3, 32
    %v298 = vld [vmem:[%s297] sm:$0xff]
    %v299 = vld [vmem:[%s297 + $0x8] sm:$0xff]
    %v300 = vld [vmem:[%s297 + $0x10] sm:$0xff]
    %v301 = vld [vmem:[%s297 + $0x18] sm:$0xff]
    %302 = vmatprep.subr.mxu0 0.0
    %303 = vmatpush1.msra.mxu0 0.0
    %304 = vmatprep.subr.mxu0 0.0
    %305 = vmatpush1.msra.mxu0 0.0
    %306 = vmatprep.subr.mxu0 0.0
    %307 = vmatpush1.msra.mxu0 0.0
    %308 = vmatprep.subr.mxu0 0.0
    %309 = vmatpush1.msra.mxu0 0.0
    %310 = vmatprep.subr.mxu0 0.0
    %311 = vmatpush1.msra.mxu0 0.0
    %312 = vmatprep.subr.mxu0 0.0
    %313 = vmatpush1.msra.mxu0 0.0
    %314 = vmatprep.subr.mxu0 0.0
    %315 = vmatpush1.msra.mxu0 0.0
    %316 = vmatprep.subr.mxu0 0.0
    %317 = vmatpush1.msra.mxu0 0.0
    %318 = vmatprep.subr.mxu0 0.0
    %319 = vmatpush1.msra.mxu0 0.0
    %320 = vmatprep.subr.mxu0 0.0
    %321 = vmatpush1.msra.mxu0 0.0
    %322 = vmatprep.subr.mxu0 0.0
    %323 = vmatpush1.msra.mxu0 0.0
    %324 = vmatprep.subr.mxu0 0.0
    %325 = vmatpush1.msra.mxu0 0.0
    %326 = vmatprep.subr.mxu0 0.0
    %327 = vmatpush1.msra.mxu0 %v301
    %328 = vmatprep.subr.mxu0 0.0
    %329 = vmatpush1.msra.mxu0 %v300
    %330 = vmatprep.subr.mxu0 0.0
    %331 = vmatpush1.msra.mxu0 %v299
    %332 = vmatprep.subr.mxu0 0.0
    %333 = vmatpush1.msra.mxu0 %v298
    %334 = vmatprep.subr.mxu0 0.0
    %335 = vmatpush2.msra.mxu0 0.0
    %336 = vmatprep.subr.mxu0 0.0
    %337 = vmatpush2.msra.mxu0 0.0
    %338 = vmatprep.subr.mxu0 0.0
    %339 = vmatpush2.msra.mxu0 0.0
    %340 = vmatprep.subr.mxu0 0.0
    %341 = vmatpush2.msra.mxu0 0.0
    %342 = vmatprep.subr.mxu0 0.0
    %343 = vmatpush2.msra.mxu0 0.0
    %344 = vmatprep.subr.mxu0 0.0
    %345 = vmatpush2.msra.mxu0 0.0
    %346 = vmatprep.subr.mxu0 0.0
    %347 = vmatpush2.msra.mxu0 0.0
    %348 = vmatprep.subr.mxu0 0.0
    %349 = vmatpush2.msra.mxu0 0.0
    %350 = vmatprep.subr.mxu0 0.0
    %351 = vmatpush2.msra.mxu0 0.0
    %352 = vmatprep.subr.mxu0 0.0
    %353 = vmatpush2.msra.mxu0 0.0
    %354 = vmatprep.subr.mxu0 0.0
    %355 = vmatpush2.msra.mxu0 0.0
    %356 = vmatprep.subr.mxu0 0.0
    %357 = vmatpush2.msra.mxu0 0.0
    %358 = vmatprep.subr.mxu0 0.0
    %359 = vmatpush2.msra.mxu0 0.0
    %360 = vmatprep.subr.mxu0 0.0
    %361 = vmatpush2.msra.mxu0 0.0
    %362 = vmatprep.subr.mxu0 0.0
    %363 = vmatpush2.msra.mxu0 0.0
    %364 = vmatprep.subr.mxu0 0.0
    %365 = vmatpush2.msra.mxu0 0.0
    %366 = vmatprep.mubr.f32.mxu0 0.0
    %367 = vmatmul.mubr.f32.gmra.mxu0 %v51
    %v368 = vpop.f32.mrf.mxu0
    %v369 = vadd.f32 0.0, %v368
    %v370 = vpop.f32.mrf.mxu0
    %371 = vmatprep.mubr.f32.mxu0 0.0
    %372 = vmatmul.mubr.f32.gmra.mxu0 %v54
    %v373 = vpop.f32.mrf.mxu0
    %v374 = vadd.f32 0.0, %v373
    %v375 = vpop.f32.mrf.mxu0
    %376 = vdwg.mxu0
    %s377 = scalar_lea.vmem %s4, 32
    %v378 = vld [vmem:[%s377] sm:$0xff]
    %v379 = vld [vmem:[%s377 + $0x8] sm:$0xff]
    %v380 = vld [vmem:[%s377 + $0x10] sm:$0xff]
    %v381 = vld [vmem:[%s377 + $0x18] sm:$0xff]
    %382 = vmatprep.subr.mxu0 0.0
    %383 = vmatpush1.msra.mxu0 0.0
    %384 = vmatprep.subr.mxu0 0.0
    %385 = vmatpush1.msra.mxu0 0.0
    %386 = vmatprep.subr.mxu0 0.0
    %387 = vmatpush1.msra.mxu0 0.0
    %388 = vmatprep.subr.mxu0 0.0
    %389 = vmatpush1.msra.mxu0 0.0
    %390 = vmatprep.subr.mxu0 0.0
    %391 = vmatpush1.msra.mxu0 0.0
    %392 = vmatprep.subr.mxu0 0.0
    %393 = vmatpush1.msra.mxu0 0.0
    %394 = vmatprep.subr.mxu0 0.0
    %395 = vmatpush1.msra.mxu0 0.0
    %396 = vmatprep.subr.mxu0 0.0
    %397 = vmatpush1.msra.mxu0 0.0
    %398 = vmatprep.subr.mxu0 0.0
    %399 = vmatpush1.msra.mxu0 0.0
    %400 = vmatprep.subr.mxu0 0.0
    %401 = vmatpush1.msra.mxu0 0.0
    %402 = vmatprep.subr.mxu0 0.0
    %403 = vmatpush1.msra.mxu0 0.0
    %404 = vmatprep.subr.mxu0 0.0
    %405 = vmatpush1.msra.mxu0 0.0
    %406 = vmatprep.subr.mxu0 0.0
    %407 = vmatpush1.msra.mxu0 %v381
    %408 = vmatprep.subr.mxu0 0.0
    %409 = vmatpush1.msra.mxu0 %v380
    %410 = vmatprep.subr.mxu0 0.0
    %411 = vmatpush1.msra.mxu0 %v379
    %412 = vmatprep.subr.mxu0 0.0
    %413 = vmatpush1.msra.mxu0 %v378
    %414 = vmatprep.subr.mxu0 0.0
    %415 = vmatpush2.msra.mxu0 0.0
    %416 = vmatprep.subr.mxu0 0.0
    %417 = vmatpush2.msra.mxu0 0.0
    %418 = vmatprep.subr.mxu0 0.0
    %419 = vmatpush2.msra.mxu0 0.0
    %420 = vmatprep.subr.mxu0 0.0
    %421 = vmatpush2.msra.mxu0 0.0
    %422 = vmatprep.subr.mxu0 0.0
    %423 = vmatpush2.msra.mxu0 0.0
    %424 = vmatprep.subr.mxu0 0.0
    %425 = vmatpush2.msra.mxu0 0.0
    %426 = vmatprep.subr.mxu0 0.0
    %427 = vmatpush2.msra.mxu0 0.0
    %428 = vmatprep.subr.mxu0 0.0
    %429 = vmatpush2.msra.mxu0 0.0
    %430 = vmatprep.subr.mxu0 0.0
    %431 = vmatpush2.msra.mxu0 0.0
    %432 = vmatprep.subr.mxu0 0.0
    %433 = vmatpush2.msra.mxu0 0.0
    %434 = vmatprep.subr.mxu0 0.0
    %435 = vmatpush2.msra.mxu0 0.0
    %436 = vmatprep.subr.mxu0 0.0
    %437 = vmatpush2.msra.mxu0 0.0
    %438 = vmatprep.subr.mxu0 0.0
    %439 = vmatpush2.msra.mxu0 0.0
    %440 = vmatprep.subr.mxu0 0.0
    %441 = vmatpush2.msra.mxu0 0.0
    %442 = vmatprep.subr.mxu0 0.0
    %443 = vmatpush2.msra.mxu0 0.0
    %444 = vmatprep.subr.mxu0 0.0
    %445 = vmatpush2.msra.mxu0 0.0
    %446 = vmatprep.mubr.f32.mxu0 0.0
    %447 = vmatmul.mubr.f32.gmra.mxu0 %v136
    %v448 = vpop.f32.mrf.mxu0
    %v449 = vadd.f32 0.0, %v448
    %v450 = vpop.f32.mrf.mxu0
    %451 = vmatprep.mubr.f32.mxu0 0.0
    %452 = vmatmul.mubr.f32.gmra.mxu0 %v139
    %v453 = vpop.f32.mrf.mxu0
    %v454 = vadd.f32 0.0, %v453
    %v455 = vpop.f32.mrf.mxu0
    %456 = vdwg.mxu0
    %457 = vmatprep.subr.mxu0 0.0
    %458 = vmatpush1.msra.mxu0 0.0
    %459 = vmatprep.subr.mxu0 0.0
    %460 = vmatpush1.msra.mxu0 0.0
    %461 = vmatprep.subr.mxu0 0.0
    %462 = vmatpush1.msra.mxu0 0.0
    %463 = vmatprep.subr.mxu0 0.0
    %464 = vmatpush1.msra.mxu0 0.0
    %465 = vmatprep.subr.mxu0 0.0
    %466 = vmatpush1.msra.mxu0 0.0
    %467 = vmatprep.subr.mxu0 0.0
    %468 = vmatpush1.msra.mxu0 0.0
    %469 = vmatprep.subr.mxu0 0.0
    %470 = vmatpush1.msra.mxu0 0.0
    %471 = vmatprep.subr.mxu0 0.0
    %472 = vmatpush1.msra.mxu0 0.0
    %473 = vmatprep.subr.mxu0 0.0
    %474 = vmatpush1.msra.mxu0 0.0
    %475 = vmatprep.subr.mxu0 0.0
    %476 = vmatpush1.msra.mxu0 0.0
    %477 = vmatprep.subr.mxu0 0.0
    %478 = vmatpush1.msra.mxu0 0.0
    %479 = vmatprep.subr.mxu0 0.0
    %480 = vmatpush1.msra.mxu0 0.0
    %481 = vmatprep.subr.mxu0 0.0
    %482 = vmatpush1.msra.mxu0 %v381
    %483 = vmatprep.subr.mxu0 0.0
    %484 = vmatpush1.msra.mxu0 %v380
    %485 = vmatprep.subr.mxu0 0.0
    %486 = vmatpush1.msra.mxu0 %v379
    %487 = vmatprep.subr.mxu0 0.0
    %488 = vmatpush1.msra.mxu0 %v378
    %489 = vmatprep.subr.mxu0 0.0
    %490 = vmatpush2.msra.mxu0 0.0
    %491 = vmatprep.subr.mxu0 0.0
    %492 = vmatpush2.msra.mxu0 0.0
    %493 = vmatprep.subr.mxu0 0.0
    %494 = vmatpush2.msra.mxu0 0.0
    %495 = vmatprep.subr.mxu0 0.0
    %496 = vmatpush2.msra.mxu0 0.0
    %497 = vmatprep.subr.mxu0 0.0
    %498 = vmatpush2.msra.mxu0 0.0
    %499 = vmatprep.subr.mxu0 0.0
    %500 = vmatpush2.msra.mxu0 0.0
    %501 = vmatprep.subr.mxu0 0.0
    %502 = vmatpush2.msra.mxu0 0.0
    %503 = vmatprep.subr.mxu0 0.0
    %504 = vmatpush2.msra.mxu0 0.0
    %505 = vmatprep.subr.mxu0 0.0
    %506 = vmatpush2.msra.mxu0 0.0
    %507 = vmatprep.subr.mxu0 0.0
    %508 = vmatpush2.msra.mxu0 0.0
    %509 = vmatprep.subr.mxu0 0.0
    %510 = vmatpush2.msra.mxu0 0.0
    %511 = vmatprep.subr.mxu0 0.0
    %512 = vmatpush2.msra.mxu0 0.0
    %513 = vmatprep.subr.mxu0 0.0
    %514 = vmatpush2.msra.mxu0 0.0
    %515 = vmatprep.subr.mxu0 0.0
    %516 = vmatpush2.msra.mxu0 0.0
    %517 = vmatprep.subr.mxu0 0.0
    %518 = vmatpush2.msra.mxu0 0.0
    %519 = vmatprep.subr.mxu0 0.0
    %520 = vmatpush2.msra.mxu0 0.0
    %521 = vmatprep.mubr.f32.mxu0 0.0
    %522 = vmatmul.mubr.f32.gmra.mxu0 %v217
    %v523 = vpop.f32.mrf.mxu0
    %v524 = vadd.f32 0.0, %v523
    %v525 = vpop.f32.mrf.mxu0
    %526 = vmatprep.mubr.f32.mxu0 0.0
    %527 = vmatmul.mubr.f32.gmra.mxu0 %v220
    %v528 = vpop.f32.mrf.mxu0
    %v529 = vadd.f32 0.0, %v528
    %v530 = vpop.f32.mrf.mxu0
    %531 = vdwg.mxu0
    %s532 = scalar_lea.vmem %s3, 64
    %v533 = vld [vmem:[%s532] sm:$0xff]
    %v534 = vld [vmem:[%s532 + $0x8] sm:$0xff]
    %v535 = vld [vmem:[%s532 + $0x10] sm:$0xff]
    %v536 = vld [vmem:[%s532 + $0x18] sm:$0xff]
    %537 = vmatprep.subr.mxu0 0.0
    %538 = vmatpush1.msra.mxu0 0.0
    %539 = vmatprep.subr.mxu0 0.0
    %540 = vmatpush1.msra.mxu0 0.0
    %541 = vmatprep.subr.mxu0 0.0
    %542 = vmatpush1.msra.mxu0 0.0
    %543 = vmatprep.subr.mxu0 0.0
    %544 = vmatpush1.msra.mxu0 0.0
    %545 = vmatprep.subr.mxu0 0.0
    %546 = vmatpush1.msra.mxu0 0.0
    %547 = vmatprep.subr.mxu0 0.0
    %548 = vmatpush1.msra.mxu0 0.0
    %549 = vmatprep.subr.mxu0 0.0
    %550 = vmatpush1.msra.mxu0 0.0
    %551 = vmatprep.subr.mxu0 0.0
    %552 = vmatpush1.msra.mxu0 0.0
    %553 = vmatprep.subr.mxu0 0.0
    %554 = vmatpush1.msra.mxu0 0.0
    %555 = vmatprep.subr.mxu0 0.0
    %556 = vmatpush1.msra.mxu0 0.0
    %557 = vmatprep.subr.mxu0 0.0
    %558 = vmatpush1.msra.mxu0 0.0
    %559 = vmatprep.subr.mxu0 0.0
    %560 = vmatpush1.msra.mxu0 0.0
    %561 = vmatprep.subr.mxu0 0.0
    %562 = vmatpush1.msra.mxu0 %v536
    %563 = vmatprep.subr.mxu0 0.0
    %564 = vmatpush1.msra.mxu0 %v535
    %565 = vmatprep.subr.mxu0 0.0
    %566 = vmatpush1.msra.mxu0 %v534
    %567 = vmatprep.subr.mxu0 0.0
    %568 = vmatpush1.msra.mxu0 %v533
    %569 = vmatprep.subr.mxu0 0.0
    %570 = vmatpush2.msra.mxu0 0.0
    %571 = vmatprep.subr.mxu0 0.0
    %572 = vmatpush2.msra.mxu0 0.0
    %573 = vmatprep.subr.mxu0 0.0
    %574 = vmatpush2.msra.mxu0 0.0
    %575 = vmatprep.subr.mxu0 0.0
    %576 = vmatpush2.msra.mxu0 0.0
    %577 = vmatprep.subr.mxu0 0.0
    %578 = vmatpush2.msra.mxu0 0.0
    %579 = vmatprep.subr.mxu0 0.0
    %580 = vmatpush2.msra.mxu0 0.0
    %581 = vmatprep.subr.mxu0 0.0
    %582 = vmatpush2.msra.mxu0 0.0
    %583 = vmatprep.subr.mxu0 0.0
    %584 = vmatpush2.msra.mxu0 0.0
    %585 = vmatprep.subr.mxu0 0.0
    %586 = vmatpush2.msra.mxu0 0.0
    %587 = vmatprep.subr.mxu0 0.0
    %588 = vmatpush2.msra.mxu0 0.0
    %589 = vmatprep.subr.mxu0 0.0
    %590 = vmatpush2.msra.mxu0 0.0
    %591 = vmatprep.subr.mxu0 0.0
    %592 = vmatpush2.msra.mxu0 0.0
    %593 = vmatprep.subr.mxu0 0.0
    %594 = vmatpush2.msra.mxu0 0.0
    %595 = vmatprep.subr.mxu0 0.0
    %596 = vmatpush2.msra.mxu0 0.0
    %597 = vmatprep.subr.mxu0 0.0
    %598 = vmatpush2.msra.mxu0 0.0
    %599 = vmatprep.subr.mxu0 0.0
    %600 = vmatpush2.msra.mxu0 0.0
    %601 = vmatprep.mubr.f32.mxu0 0.0
    %602 = vmatmul.mubr.f32.gmra.mxu0 %v51
    %v603 = vpop.f32.mrf.mxu0
    %v604 = vadd.f32 0.0, %v603
    %v605 = vpop.f32.mrf.mxu0
    %606 = vmatprep.mubr.f32.mxu0 0.0
    %607 = vmatmul.mubr.f32.gmra.mxu0 %v54
    %v608 = vpop.f32.mrf.mxu0
    %v609 = vadd.f32 0.0, %v608
    %v610 = vpop.f32.mrf.mxu0
    %611 = vdwg.mxu0
    %s612 = scalar_lea.vmem %s4, 64
    %v613 = vld [vmem:[%s612] sm:$0xff]
    %v614 = vld [vmem:[%s612 + $0x8] sm:$0xff]
    %v615 = vld [vmem:[%s612 + $0x10] sm:$0xff]
    %v616 = vld [vmem:[%s612 + $0x18] sm:$0xff]
    %617 = vmatprep.subr.mxu0 0.0
    %618 = vmatpush1.msra.mxu0 0.0
    %619 = vmatprep.subr.mxu0 0.0
    %620 = vmatpush1.msra.mxu0 0.0
    %621 = vmatprep.subr.mxu0 0.0
    %622 = vmatpush1.msra.mxu0 0.0
    %623 = vmatprep.subr.mxu0 0.0
    %624 = vmatpush1.msra.mxu0 0.0
    %625 = vmatprep.subr.mxu0 0.0
    %626 = vmatpush1.msra.mxu0 0.0
    %627 = vmatprep.subr.mxu0 0.0
    %628 = vmatpush1.msra.mxu0 0.0
    %629 = vmatprep.subr.mxu0 0.0
    %630 = vmatpush1.msra.mxu0 0.0
    %631 = vmatprep.subr.mxu0 0.0
    %632 = vmatpush1.msra.mxu0 0.0
    %633 = vmatprep.subr.mxu0 0.0
    %634 = vmatpush1.msra.mxu0 0.0
    %635 = vmatprep.subr.mxu0 0.0
    %636 = vmatpush1.msra.mxu0 0.0
    %637 = vmatprep.subr.mxu0 0.0
    %638 = vmatpush1.msra.mxu0 0.0
    %639 = vmatprep.subr.mxu0 0.0
    %640 = vmatpush1.msra.mxu0 0.0
    %641 = vmatprep.subr.mxu0 0.0
    %642 = vmatpush1.msra.mxu0 %v616
    %643 = vmatprep.subr.mxu0 0.0
    %644 = vmatpush1.msra.mxu0 %v615
    %645 = vmatprep.subr.mxu0 0.0
    %646 = vmatpush1.msra.mxu0 %v614
    %647 = vmatprep.subr.mxu0 0.0
    %648 = vmatpush1.msra.mxu0 %v613
    %649 = vmatprep.subr.mxu0 0.0
    %650 = vmatpush2.msra.mxu0 0.0
    %651 = vmatprep.subr.mxu0 0.0
    %652 = vmatpush2.msra.mxu0 0.0
    %653 = vmatprep.subr.mxu0 0.0
    %654 = vmatpush2.msra.mxu0 0.0
    %655 = vmatprep.subr.mxu0 0.0
    %656 = vmatpush2.msra.mxu0 0.0
    %657 = vmatprep.subr.mxu0 0.0
    %658 = vmatpush2.msra.mxu0 0.0
    %659 = vmatprep.subr.mxu0 0.0
    %660 = vmatpush2.msra.mxu0 0.0
    %661 = vmatprep.subr.mxu0 0.0
    %662 = vmatpush2.msra.mxu0 0.0
    %663 = vmatprep.subr.mxu0 0.0
    %664 = vmatpush2.msra.mxu0 0.0
    %665 = vmatprep.subr.mxu0 0.0
    %666 = vmatpush2.msra.mxu0 0.0
    %667 = vmatprep.subr.mxu0 0.0
    %668 = vmatpush2.msra.mxu0 0.0
    %669 = vmatprep.subr.mxu0 0.0
    %670 = vmatpush2.msra.mxu0 0.0
    %671 = vmatprep.subr.mxu0 0.0
    %672 = vmatpush2.msra.mxu0 0.0
    %673 = vmatprep.subr.mxu0 0.0
    %674 = vmatpush2.msra.mxu0 0.0
    %675 = vmatprep.subr.mxu0 0.0
    %676 = vmatpush2.msra.mxu0 0.0
    %677 = vmatprep.subr.mxu0 0.0
    %678 = vmatpush2.msra.mxu0 0.0
    %679 = vmatprep.subr.mxu0 0.0
    %680 = vmatpush2.msra.mxu0 0.0
    %681 = vmatprep.mubr.f32.mxu0 0.0
    %682 = vmatmul.mubr.f32.gmra.mxu0 %v136
    %v683 = vpop.f32.mrf.mxu0
    %v684 = vadd.f32 0.0, %v683
    %v685 = vpop.f32.mrf.mxu0
    %686 = vmatprep.mubr.f32.mxu0 0.0
    %687 = vmatmul.mubr.f32.gmra.mxu0 %v139
    %v688 = vpop.f32.mrf.mxu0
    %v689 = vadd.f32 0.0, %v688
    %v690 = vpop.f32.mrf.mxu0
    %691 = vdwg.mxu0
    %692 = vmatprep.subr.mxu0 0.0
    %693 = vmatpush1.msra.mxu0 0.0
    %694 = vmatprep.subr.mxu0 0.0
    %695 = vmatpush1.msra.mxu0 0.0
    %696 = vmatprep.subr.mxu0 0.0
    %697 = vmatpush1.msra.mxu0 0.0
    %698 = vmatprep.subr.mxu0 0.0
    %699 = vmatpush1.msra.mxu0 0.0
    %700 = vmatprep.subr.mxu0 0.0
    %701 = vmatpush1.msra.mxu0 0.0
    %702 = vmatprep.subr.mxu0 0.0
    %703 = vmatpush1.msra.mxu0 0.0
    %704 = vmatprep.subr.mxu0 0.0
    %705 = vmatpush1.msra.mxu0 0.0
    %706 = vmatprep.subr.mxu0 0.0
    %707 = vmatpush1.msra.mxu0 0.0
    %708 = vmatprep.subr.mxu0 0.0
    %709 = vmatpush1.msra.mxu0 0.0
    %710 = vmatprep.subr.mxu0 0.0
    %711 = vmatpush1.msra.mxu0 0.0
    %712 = vmatprep.subr.mxu0 0.0
    %713 = vmatpush1.msra.mxu0 0.0
    %714 = vmatprep.subr.mxu0 0.0
    %715 = vmatpush1.msra.mxu0 0.0
    %716 = vmatprep.subr.mxu0 0.0
    %717 = vmatpush1.msra.mxu0 %v616
    %718 = vmatprep.subr.mxu0 0.0
    %719 = vmatpush1.msra.mxu0 %v615
    %720 = vmatprep.subr.mxu0 0.0
    %721 = vmatpush1.msra.mxu0 %v614
    %722 = vmatprep.subr.mxu0 0.0
    %723 = vmatpush1.msra.mxu0 %v613
    %724 = vmatprep.subr.mxu0 0.0
    %725 = vmatpush2.msra.mxu0 0.0
    %726 = vmatprep.subr.mxu0 0.0
    %727 = vmatpush2.msra.mxu0 0.0
    %728 = vmatprep.subr.mxu0 0.0
    %729 = vmatpush2.msra.mxu0 0.0
    %730 = vmatprep.subr.mxu0 0.0
    %731 = vmatpush2.msra.mxu0 0.0
    %732 = vmatprep.subr.mxu0 0.0
    %733 = vmatpush2.msra.mxu0 0.0
    %734 = vmatprep.subr.mxu0 0.0
    %735 = vmatpush2.msra.mxu0 0.0
    %736 = vmatprep.subr.mxu0 0.0
    %737 = vmatpush2.msra.mxu0 0.0
    %738 = vmatprep.subr.mxu0 0.0
    %739 = vmatpush2.msra.mxu0 0.0
    %740 = vmatprep.subr.mxu0 0.0
    %741 = vmatpush2.msra.mxu0 0.0
    %742 = vmatprep.subr.mxu0 0.0
    %743 = vmatpush2.msra.mxu0 0.0
    %744 = vmatprep.subr.mxu0 0.0
    %745 = vmatpush2.msra.mxu0 0.0
    %746 = vmatprep.subr.mxu0 0.0
    %747 = vmatpush2.msra.mxu0 0.0
    %748 = vmatprep.subr.mxu0 0.0
    %749 = vmatpush2.msra.mxu0 0.0
    %750 = vmatprep.subr.mxu0 0.0
    %751 = vmatpush2.msra.mxu0 0.0
    %752 = vmatprep.subr.mxu0 0.0
    %753 = vmatpush2.msra.mxu0 0.0
    %754 = vmatprep.subr.mxu0 0.0
    %755 = vmatpush2.msra.mxu0 0.0
    %756 = vmatprep.mubr.f32.mxu0 0.0
    %757 = vmatmul.mubr.f32.gmra.mxu0 %v217
    %v758 = vpop.f32.mrf.mxu0
    %v759 = vadd.f32 0.0, %v758
    %v760 = vpop.f32.mrf.mxu0
    %761 = vmatprep.mubr.f32.mxu0 0.0
    %762 = vmatmul.mubr.f32.gmra.mxu0 %v220
    %v763 = vpop.f32.mrf.mxu0
    %v764 = vadd.f32 0.0, %v763
    %v765 = vpop.f32.mrf.mxu0
    %766 = vdwg.mxu0
    %s767 = scalar_lea.vmem %s3, 96
    %v768 = vld [vmem:[%s767] sm:$0xff]
    %v769 = vld [vmem:[%s767 + $0x8] sm:$0xff]
    %v770 = vld [vmem:[%s767 + $0x10] sm:$0xff]
    %v771 = vld [vmem:[%s767 + $0x18] sm:$0xff]
    %772 = vmatprep.subr.mxu0 0.0
    %773 = vmatpush1.msra.mxu0 0.0
    %774 = vmatprep.subr.mxu0 0.0
    %775 = vmatpush1.msra.mxu0 0.0
    %776 = vmatprep.subr.mxu0 0.0
    %777 = vmatpush1.msra.mxu0 0.0
    %778 = vmatprep.subr.mxu0 0.0
    %779 = vmatpush1.msra.mxu0 0.0
    %780 = vmatprep.subr.mxu0 0.0
    %781 = vmatpush1.msra.mxu0 0.0
    %782 = vmatprep.subr.mxu0 0.0
    %783 = vmatpush1.msra.mxu0 0.0
    %784 = vmatprep.subr.mxu0 0.0
    %785 = vmatpush1.msra.mxu0 0.0
    %786 = vmatprep.subr.mxu0 0.0
    %787 = vmatpush1.msra.mxu0 0.0
    %788 = vmatprep.subr.mxu0 0.0
    %789 = vmatpush1.msra.mxu0 0.0
    %790 = vmatprep.subr.mxu0 0.0
    %791 = vmatpush1.msra.mxu0 0.0
    %792 = vmatprep.subr.mxu0 0.0
    %793 = vmatpush1.msra.mxu0 0.0
    %794 = vmatprep.subr.mxu0 0.0
    %795 = vmatpush1.msra.mxu0 0.0
    %796 = vmatprep.subr.mxu0 0.0
    %797 = vmatpush1.msra.mxu0 %v771
    %798 = vmatprep.subr.mxu0 0.0
    %799 = vmatpush1.msra.mxu0 %v770
    %800 = vmatprep.subr.mxu0 0.0
    %801 = vmatpush1.msra.mxu0 %v769
    %802 = vmatprep.subr.mxu0 0.0
    %803 = vmatpush1.msra.mxu0 %v768
    %804 = vmatprep.subr.mxu0 0.0
    %805 = vmatpush2.msra.mxu0 0.0
    %806 = vmatprep.subr.mxu0 0.0
    %807 = vmatpush2.msra.mxu0 0.0
    %808 = vmatprep.subr.mxu0 0.0
    %809 = vmatpush2.msra.mxu0 0.0
    %810 = vmatprep.subr.mxu0 0.0
    %811 = vmatpush2.msra.mxu0 0.0
    %812 = vmatprep.subr.mxu0 0.0
    %813 = vmatpush2.msra.mxu0 0.0
    %814 = vmatprep.subr.mxu0 0.0
    %815 = vmatpush2.msra.mxu0 0.0
    %816 = vmatprep.subr.mxu0 0.0
    %817 = vmatpush2.msra.mxu0 0.0
    %818 = vmatprep.subr.mxu0 0.0
    %819 = vmatpush2.msra.mxu0 0.0
    %820 = vmatprep.subr.mxu0 0.0
    %821 = vmatpush2.msra.mxu0 0.0
    %822 = vmatprep.subr.mxu0 0.0
    %823 = vmatpush2.msra.mxu0 0.0
    %824 = vmatprep.subr.mxu0 0.0
    %825 = vmatpush2.msra.mxu0 0.0
    %826 = vmatprep.subr.mxu0 0.0
    %827 = vmatpush2.msra.mxu0 0.0
    %828 = vmatprep.subr.mxu0 0.0
    %829 = vmatpush2.msra.mxu0 0.0
    %830 = vmatprep.subr.mxu0 0.0
    %831 = vmatpush2.msra.mxu0 0.0
    %832 = vmatprep.subr.mxu0 0.0
    %833 = vmatpush2.msra.mxu0 0.0
    %834 = vmatprep.subr.mxu0 0.0
    %835 = vmatpush2.msra.mxu0 0.0
    %836 = vmatprep.mubr.f32.mxu0 0.0
    %837 = vmatmul.mubr.f32.gmra.mxu0 %v51
    %v838 = vpop.f32.mrf.mxu0
    %v839 = vadd.f32 0.0, %v838
    %v840 = vpop.f32.mrf.mxu0
    %841 = vmatprep.mubr.f32.mxu0 0.0
    %842 = vmatmul.mubr.f32.gmra.mxu0 %v54
    %v843 = vpop.f32.mrf.mxu0
    %v844 = vadd.f32 0.0, %v843
    %v845 = vpop.f32.mrf.mxu0
    %846 = vdwg.mxu0
    %s847 = scalar_lea.vmem %s4, 96
    %v848 = vld [vmem:[%s847] sm:$0xff]
    %v849 = vld [vmem:[%s847 + $0x8] sm:$0xff]
    %v850 = vld [vmem:[%s847 + $0x10] sm:$0xff]
    %v851 = vld [vmem:[%s847 + $0x18] sm:$0xff]
    %852 = vmatprep.subr.mxu0 0.0
    %853 = vmatpush1.msra.mxu0 0.0
    %854 = vmatprep.subr.mxu0 0.0
    %855 = vmatpush1.msra.mxu0 0.0
    %856 = vmatprep.subr.mxu0 0.0
    %857 = vmatpush1.msra.mxu0 0.0
    %858 = vmatprep.subr.mxu0 0.0
    %859 = vmatpush1.msra.mxu0 0.0
    %860 = vmatprep.subr.mxu0 0.0
    %861 = vmatpush1.msra.mxu0 0.0
    %862 = vmatprep.subr.mxu0 0.0
    %863 = vmatpush1.msra.mxu0 0.0
    %864 = vmatprep.subr.mxu0 0.0
    %865 = vmatpush1.msra.mxu0 0.0
    %866 = vmatprep.subr.mxu0 0.0
    %867 = vmatpush1.msra.mxu0 0.0
    %868 = vmatprep.subr.mxu0 0.0
    %869 = vmatpush1.msra.mxu0 0.0
    %870 = vmatprep.subr.mxu0 0.0
    %871 = vmatpush1.msra.mxu0 0.0
    %872 = vmatprep.subr.mxu0 0.0
    %873 = vmatpush1.msra.mxu0 0.0
    %874 = vmatprep.subr.mxu0 0.0
    %875 = vmatpush1.msra.mxu0 0.0
    %876 = vmatprep.subr.mxu0 0.0
    %877 = vmatpush1.msra.mxu0 %v851
    %878 = vmatprep.subr.mxu0 0.0
    %879 = vmatpush1.msra.mxu0 %v850
    %880 = vmatprep.subr.mxu0 0.0
    %881 = vmatpush1.msra.mxu0 %v849
    %882 = vmatprep.subr.mxu0 0.0
    %883 = vmatpush1.msra.mxu0 %v848
    %884 = vmatprep.subr.mxu0 0.0
    %885 = vmatpush2.msra.mxu0 0.0
    %886 = vmatprep.subr.mxu0 0.0
    %887 = vmatpush2.msra.mxu0 0.0
    %888 = vmatprep.subr.mxu0 0.0
    %889 = vmatpush2.msra.mxu0 0.0
    %890 = vmatprep.subr.mxu0 0.0
    %891 = vmatpush2.msra.mxu0 0.0
    %892 = vmatprep.subr.mxu0 0.0
    %893 = vmatpush2.msra.mxu0 0.0
    %894 = vmatprep.subr.mxu0 0.0
    %895 = vmatpush2.msra.mxu0 0.0
    %896 = vmatprep.subr.mxu0 0.0
    %897 = vmatpush2.msra.mxu0 0.0
    %898 = vmatprep.subr.mxu0 0.0
    %899 = vmatpush2.msra.mxu0 0.0
    %900 = vmatprep.subr.mxu0 0.0
    %901 = vmatpush2.msra.mxu0 0.0
    %902 = vmatprep.subr.mxu0 0.0
    %903 = vmatpush2.msra.mxu0 0.0
    %904 = vmatprep.subr.mxu0 0.0
    %905 = vmatpush2.msra.mxu0 0.0
    %906 = vmatprep.subr.mxu0 0.0
    %907 = vmatpush2.msra.mxu0 0.0
    %908 = vmatprep.subr.mxu0 0.0
    %909 = vmatpush2.msra.mxu0 0.0
    %910 = vmatprep.subr.mxu0 0.0
    %911 = vmatpush2.msra.mxu0 0.0
    %912 = vmatprep.subr.mxu0 0.0
    %913 = vmatpush2.msra.mxu0 0.0
    %914 = vmatprep.subr.mxu0 0.0
    %915 = vmatpush2.msra.mxu0 0.0
    %916 = vmatprep.mubr.f32.mxu0 0.0
    %917 = vmatmul.mubr.f32.gmra.mxu0 %v136
    %v918 = vpop.f32.mrf.mxu0
    %v919 = vadd.f32 0.0, %v918
    %v920 = vpop.f32.mrf.mxu0
    %921 = vmatprep.mubr.f32.mxu0 0.0
    %922 = vmatmul.mubr.f32.gmra.mxu0 %v139
    %v923 = vpop.f32.mrf.mxu0
    %v924 = vadd.f32 0.0, %v923
    %v925 = vpop.f32.mrf.mxu0
    %926 = vdwg.mxu0
    %927 = vmatprep.subr.mxu0 0.0
    %928 = vmatpush1.msra.mxu0 0.0
    %929 = vmatprep.subr.mxu0 0.0
    %930 = vmatpush1.msra.mxu0 0.0
    %931 = vmatprep.subr.mxu0 0.0
    %932 = vmatpush1.msra.mxu0 0.0
    %933 = vmatprep.subr.mxu0 0.0
    %934 = vmatpush1.msra.mxu0 0.0
    %935 = vmatprep.subr.mxu0 0.0
    %936 = vmatpush1.msra.mxu0 0.0
    %937 = vmatprep.subr.mxu0 0.0
    %938 = vmatpush1.msra.mxu0 0.0
    %939 = vmatprep.subr.mxu0 0.0
    %940 = vmatpush1.msra.mxu0 0.0
    %941 = vmatprep.subr.mxu0 0.0
    %942 = vmatpush1.msra.mxu0 0.0
    %943 = vmatprep.subr.mxu0 0.0
    %944 = vmatpush1.msra.mxu0 0.0
    %945 = vmatprep.subr.mxu0 0.0
    %946 = vmatpush1.msra.mxu0 0.0
    %947 = vmatprep.subr.mxu0 0.0
    %948 = vmatpush1.msra.mxu0 0.0
    %949 = vmatprep.subr.mxu0 0.0
    %950 = vmatpush1.msra.mxu0 0.0
    %951 = vmatprep.subr.mxu0 0.0
    %952 = vmatpush1.msra.mxu0 %v851
    %953 = vmatprep.subr.mxu0 0.0
    %954 = vmatpush1.msra.mxu0 %v850
    %955 = vmatprep.subr.mxu0 0.0
    %956 = vmatpush1.msra.mxu0 %v849
    %957 = vmatprep.subr.mxu0 0.0
    %958 = vmatpush1.msra.mxu0 %v848
    %959 = vmatprep.subr.mxu0 0.0
    %960 = vmatpush2.msra.mxu0 0.0
    %961 = vmatprep.subr.mxu0 0.0
    %962 = vmatpush2.msra.mxu0 0.0
    %963 = vmatprep.subr.mxu0 0.0
    %964 = vmatpush2.msra.mxu0 0.0
    %965 = vmatprep.subr.mxu0 0.0
    %966 = vmatpush2.msra.mxu0 0.0
    %967 = vmatprep.subr.mxu0 0.0
    %968 = vmatpush2.msra.mxu0 0.0
    %969 = vmatprep.subr.mxu0 0.0
    %970 = vmatpush2.msra.mxu0 0.0
    %971 = vmatprep.subr.mxu0 0.0
    %972 = vmatpush2.msra.mxu0 0.0
    %973 = vmatprep.subr.mxu0 0.0
    %974 = vmatpush2.msra.mxu0 0.0
    %975 = vmatprep.subr.mxu0 0.0
    %976 = vmatpush2.msra.mxu0 0.0
    %977 = vmatprep.subr.mxu0 0.0
    %978 = vmatpush2.msra.mxu0 0.0
    %979 = vmatprep.subr.mxu0 0.0
    %980 = vmatpush2.msra.mxu0 0.0
    %981 = vmatprep.subr.mxu0 0.0
    %982 = vmatpush2.msra.mxu0 0.0
    %983 = vmatprep.subr.mxu0 0.0
    %984 = vmatpush2.msra.mxu0 0.0
    %985 = vmatprep.subr.mxu0 0.0
    %986 = vmatpush2.msra.mxu0 0.0
    %987 = vmatprep.subr.mxu0 0.0
    %988 = vmatpush2.msra.mxu0 0.0
    %989 = vmatprep.subr.mxu0 0.0
    %990 = vmatpush2.msra.mxu0 0.0
    %991 = vmatprep.mubr.f32.mxu0 0.0
    %992 = vmatmul.mubr.f32.gmra.mxu0 %v217
    %v993 = vpop.f32.mrf.mxu0
    %v994 = vadd.f32 0.0, %v993
    %v995 = vpop.f32.mrf.mxu0
    %996 = vmatprep.mubr.f32.mxu0 0.0
    %997 = vmatmul.mubr.f32.gmra.mxu0 %v220
    %v998 = vpop.f32.mrf.mxu0
    %v999 = vadd.f32 0.0, %v998
    %v1000 = vpop.f32.mrf.mxu0
    %1001 = vdwg.mxu0
    %v1002 = vld [vmem:[%s6] sm:$0xff]
    %v1003 = vld [vmem:[%s6 + $0x8] sm:$0xff]
    %v1004 = vld [vmem:[%s6 + $0x10] sm:$0xff]
    %v1005 = vld [vmem:[%s6 + $0x18] sm:$0xff]
    %v1006 = vld [vmem:[%s6 + $0x20] sm:$0xff]
    %v1007 = vld [vmem:[%s6 + $0x28] sm:$0xff]
    %v1008 = vld [vmem:[%s6 + $0x30] sm:$0xff]
    %v1009 = vld [vmem:[%s6 + $0x38] sm:$0xff]
    %vm1010 = vcmask 64512
    %v1012 = vsel %vm1010, %v123, 0
    %v1015 = vsel %vm1010, %v128, 0
    %v1018 = vsel %vm1010, %v369, 0
    %v1021 = vsel %vm1010, %v374, 0
    %v1024 = vsel %vm1010, %v604, 0
    %v1027 = vsel %vm1010, %v609, 0
    %v1030 = vsel %vm1010, %v839, 0
    %v1033 = vsel %vm1010, %v844, 0
    %v1036 = vsel %vm1010, %v208, 0
    %v1039 = vsel %vm1010, %v213, 0
    %v1042 = vsel %vm1010, %v449, 0
    %v1045 = vsel %vm1010, %v454, 0
    %v1048 = vsel %vm1010, %v684, 0
    %v1051 = vsel %vm1010, %v689, 0
    %v1054 = vsel %vm1010, %v919, 0
    %v1057 = vsel %vm1010, %v924, 0
    %1059 = vmatprep.subr.mxu0 0.0
    %1060 = vmatpush1.xpose.msra.mxu0 0.0
    %1061 = vmatprep.subr.mxu0 0.0
    %1062 = vmatpush1.xpose.msra.mxu0 0.0
    %1063 = vmatprep.subr.mxu0 0.0
    %1064 = vmatpush1.xpose.msra.mxu0 0.0
    %1065 = vmatprep.subr.mxu0 0.0
    %1066 = vmatpush1.xpose.msra.mxu0 0.0
    %1067 = vmatprep.subr.mxu0 0.0
    %1068 = vmatpush1.xpose.msra.mxu0 0.0
    %1069 = vmatprep.subr.mxu0 0.0
    %1070 = vmatpush1.xpose.msra.mxu0 0.0
    %1071 = vmatprep.subr.mxu0 0.0
    %1072 = vmatpush1.xpose.msra.mxu0 0.0
    %1073 = vmatprep.subr.mxu0 0.0
    %1074 = vmatpush1.xpose.msra.mxu0 0.0
    %1075 = vmatprep.subr.mxu0 0.0
    %1076 = vmatpush1.xpose.msra.mxu0 %v1057
    %1077 = vmatprep.subr.mxu0 0.0
    %1078 = vmatpush1.xpose.msra.mxu0 %v1054
    %1079 = vmatprep.subr.mxu0 0.0
    %1080 = vmatpush1.xpose.msra.mxu0 %v1051
    %1081 = vmatprep.subr.mxu0 0.0
    %1082 = vmatpush1.xpose.msra.mxu0 %v1048
    %1083 = vmatprep.subr.mxu0 0.0
    %1084 = vmatpush1.xpose.msra.mxu0 %v1045
    %1085 = vmatprep.subr.mxu0 0.0
    %1086 = vmatpush1.xpose.msra.mxu0 %v1042
    %1087 = vmatprep.subr.mxu0 0.0
    %1088 = vmatpush1.xpose.msra.mxu0 %v1039
    %1089 = vmatprep.subr.mxu0 0.0
    %1090 = vmatpush1.xpose.msra.mxu0 %v1036
    %1091 = vmatprep.subr.mxu0 0.0
    %1092 = vmatpush2.xpose.msra.mxu0 0.0
    %1093 = vmatprep.subr.mxu0 0.0
    %1094 = vmatpush2.xpose.msra.mxu0 0.0
    %1095 = vmatprep.subr.mxu0 0.0
    %1096 = vmatpush2.xpose.msra.mxu0 0.0
    %1097 = vmatprep.subr.mxu0 0.0
    %1098 = vmatpush2.xpose.msra.mxu0 0.0
    %1099 = vmatprep.subr.mxu0 0.0
    %1100 = vmatpush2.xpose.msra.mxu0 0.0
    %1101 = vmatprep.subr.mxu0 0.0
    %1102 = vmatpush2.xpose.msra.mxu0 0.0
    %1103 = vmatprep.subr.mxu0 0.0
    %1104 = vmatpush2.xpose.msra.mxu0 0.0
    %1105 = vmatprep.subr.mxu0 0.0
    %1106 = vmatpush2.xpose.msra.mxu0 0.0
    %1107 = vmatprep.subr.mxu0 0.0
    %1108 = vmatpush2.xpose.msra.mxu0 0.0
    %1109 = vmatprep.subr.mxu0 0.0
    %1110 = vmatpush2.xpose.msra.mxu0 0.0
    %1111 = vmatprep.subr.mxu0 0.0
    %1112 = vmatpush2.xpose.msra.mxu0 0.0
    %1113 = vmatprep.subr.mxu0 0.0
    %1114 = vmatpush2.xpose.msra.mxu0 0.0
    %1115 = vmatprep.subr.mxu0 0.0
    %1116 = vmatpush2.xpose.msra.mxu0 0.0
    %1117 = vmatprep.subr.mxu0 0.0
    %1118 = vmatpush2.xpose.msra.mxu0 0.0
    %1119 = vmatprep.subr.mxu0 0.0
    %1120 = vmatpush2.xpose.msra.mxu0 0.0
    %1121 = vmatprep.subr.mxu0 0.0
    %1122 = vmatpush2.xpose.msra.mxu0 0.0
    %1123 = vmatprep.mubr.f32.mxu0 0.0
    %1124 = vmatmul.mubr.f32.gmra.mxu0 %v1012
    %v1125 = vpop.f32.mrf.mxu0
    %v1126 = vadd.f32 %v1002, %v1125
    %v1127 = vpop.f32.mrf.mxu0
    %1128 = vmatprep.mubr.f32.mxu0 0.0
    %1129 = vmatmul.mubr.f32.gmra.mxu0 %v1015
    %v1130 = vpop.f32.mrf.mxu0
    %v1131 = vadd.f32 %v1003, %v1130
    %v1132 = vpop.f32.mrf.mxu0
    %1133 = vmatprep.mubr.f32.mxu0 0.0
    %1134 = vmatmul.mubr.f32.gmra.mxu0 %v1018
    %v1135 = vpop.f32.mrf.mxu0
    %v1136 = vadd.f32 %v1004, %v1135
    %v1137 = vpop.f32.mrf.mxu0
    %1138 = vmatprep.mubr.f32.mxu0 0.0
    %1139 = vmatmul.mubr.f32.gmra.mxu0 %v1021
    %v1140 = vpop.f32.mrf.mxu0
    %v1141 = vadd.f32 %v1005, %v1140
    %v1142 = vpop.f32.mrf.mxu0
    %1143 = vmatprep.mubr.f32.mxu0 0.0
    %1144 = vmatmul.mubr.f32.gmra.mxu0 %v1024
    %v1145 = vpop.f32.mrf.mxu0
    %v1146 = vadd.f32 %v1006, %v1145
    %v1147 = vpop.f32.mrf.mxu0
    %1148 = vmatprep.mubr.f32.mxu0 0.0
    %1149 = vmatmul.mubr.f32.gmra.mxu0 %v1027
    %v1150 = vpop.f32.mrf.mxu0
    %v1151 = vadd.f32 %v1007, %v1150
    %v1152 = vpop.f32.mrf.mxu0
    %1153 = vmatprep.mubr.f32.mxu0 0.0
    %1154 = vmatmul.mubr.f32.gmra.mxu0 %v1030
    %v1155 = vpop.f32.mrf.mxu0
    %v1156 = vadd.f32 %v1008, %v1155
    %v1157 = vpop.f32.mrf.mxu0
    %1158 = vmatprep.mubr.f32.mxu0 0.0
    %1159 = vmatmul.mubr.f32.gmra.mxu0 %v1033
    %v1160 = vpop.f32.mrf.mxu0
    %v1161 = vadd.f32 %v1009, %v1160
    %v1162 = vpop.f32.mrf.mxu0
    %1163 = vdwg.mxu0
    %vm1164 = vcmask 523264
    %v1165 = vsel %vm1164, %v1126, -inf
    %1166 = vmax.xlane.f32.xlu0 %v1165
    %v1167 = vpop.xlane.xlu0 %1166
    %v1168 = vsel %vm1164, %v1131, -inf
    %1169 = vmax.xlane.f32.xlu0 %v1168
    %v1170 = vpop.xlane.xlu0 %1169
    %v1171 = vsel %vm1164, %v1136, -inf
    %1172 = vmax.xlane.f32.xlu0 %v1171
    %v1173 = vpop.xlane.xlu0 %1172
    %v1174 = vsel %vm1164, %v1141, -inf
    %1175 = vmax.xlane.f32.xlu0 %v1174
    %v1176 = vpop.xlane.xlu0 %1175
    %v1177 = vsel %vm1164, %v1146, -inf
    %1178 = vmax.xlane.f32.xlu0 %v1177
    %v1179 = vpop.xlane.xlu0 %1178
    %v1180 = vsel %vm1164, %v1151, -inf
    %1181 = vmax.xlane.f32.xlu0 %v1180
    %v1182 = vpop.xlane.xlu0 %1181
    %v1183 = vsel %vm1164, %v1156, -inf
    %1184 = vmax.xlane.f32.xlu0 %v1183
    %v1185 = vpop.xlane.xlu0 %1184
    %v1186 = vsel %vm1164, %v1161, -inf
    %1187 = vmax.xlane.f32.xlu0 %v1186
    %v1188 = vpop.xlane.xlu0 %1187
    %v1189 = vsub.f32 %v1126, %v1167
    %v1190 = vsub.f32 %v1131, %v1170
    %v1191 = vsub.f32 %v1136, %v1173
    %v1192 = vsub.f32 %v1141, %v1176
    %v1193 = vsub.f32 %v1146, %v1179
    %v1194 = vsub.f32 %v1151, %v1182
    %v1195 = vsub.f32 %v1156, %v1185
    %v1196 = vsub.f32 %v1161, %v1188
    %v1197 = vmul.f32 %v1189, 1.442695
    %v1198 = vpow.pop %v1197
    %v1199 = vmul.f32 %v1190, 1.442695
    %v1200 = vpow.pop %v1199
    %v1201 = vmul.f32 %v1191, 1.442695
    %v1202 = vpow.pop %v1201
    %v1203 = vmul.f32 %v1192, 1.442695
    %v1204 = vpow.pop %v1203
    %v1205 = vmul.f32 %v1193, 1.442695
    %v1206 = vpow.pop %v1205
    %v1207 = vmul.f32 %v1194, 1.442695
    %v1208 = vpow.pop %v1207
    %v1209 = vmul.f32 %v1195, 1.442695
    %v1210 = vpow.pop %v1209
    %v1211 = vmul.f32 %v1196, 1.442695
    %v1212 = vpow.pop %v1211
    %v1213 = vsel %vm1164, %v1198, 0.0
    %1214 = vadd.xlane.f32.xlu0 %v1213
    %v1215 = vpop.xlane.xlu0 %1214
    %v1216 = vsel %vm1164, %v1200, 0.0
    %1217 = vadd.xlane.f32.xlu0 %v1216
    %v1218 = vpop.xlane.xlu0 %1217
    %v1219 = vsel %vm1164, %v1202, 0.0
    %1220 = vadd.xlane.f32.xlu0 %v1219
    %v1221 = vpop.xlane.xlu0 %1220
    %v1222 = vsel %vm1164, %v1204, 0.0
    %1223 = vadd.xlane.f32.xlu0 %v1222
    %v1224 = vpop.xlane.xlu0 %1223
    %v1225 = vsel %vm1164, %v1206, 0.0
    %1226 = vadd.xlane.f32.xlu0 %v1225
    %v1227 = vpop.xlane.xlu0 %1226
    %v1228 = vsel %vm1164, %v1208, 0.0
    %1229 = vadd.xlane.f32.xlu0 %v1228
    %v1230 = vpop.xlane.xlu0 %1229
    %v1231 = vsel %vm1164, %v1210, 0.0
    %1232 = vadd.xlane.f32.xlu0 %v1231
    %v1233 = vpop.xlane.xlu0 %1232
    %v1234 = vsel %vm1164, %v1212, 0.0
    %1235 = vadd.xlane.f32.xlu0 %v1234
    %v1236 = vpop.xlane.xlu0 %1235
    %v1237 = vrcp.pop %v1215
    %v1238 = vrcp.pop %v1218
    %v1239 = vrcp.pop %v1221
    %v1240 = vrcp.pop %v1224
    %v1241 = vrcp.pop %v1227
    %v1242 = vrcp.pop %v1230
    %v1243 = vrcp.pop %v1233
    %v1244 = vrcp.pop %v1236
    %v1245 = vmul.f32 %v1198, %v1237
    %v1246 = vmul.f32 %v1200, %v1238
    %v1247 = vmul.f32 %v1202, %v1239
    %v1248 = vmul.f32 %v1204, %v1240
    %v1249 = vmul.f32 %v1206, %v1241
    %v1250 = vmul.f32 %v1208, %v1242
    %v1251 = vmul.f32 %v1210, %v1243
    %v1252 = vmul.f32 %v1212, %v1244
    %v1254 = vsel %vm1164, %v1245, 0
    %v1257 = vsel %vm1164, %v1246, 0
    %v1260 = vsel %vm1164, %v1247, 0
    %v1263 = vsel %vm1164, %v1248, 0
    %v1266 = vsel %vm1164, %v1249, 0
    %v1269 = vsel %vm1164, %v1250, 0
    %v1272 = vsel %vm1164, %v1251, 0
    %v1275 = vsel %vm1164, %v1252, 0
    %1277 = vmatprep.subr.mxu0 0.0
    %1278 = vmatpush1.msra.mxu0 0.0
    %1279 = vmatprep.subr.mxu0 0.0
    %1280 = vmatpush1.msra.mxu0 0.0
    %1281 = vmatprep.subr.mxu0 0.0
    %1282 = vmatpush1.msra.mxu0 0.0
    %1283 = vmatprep.subr.mxu0 0.0
    %1284 = vmatpush1.msra.mxu0 0.0
    %1285 = vmatprep.subr.mxu0 0.0
    %1286 = vmatpush1.msra.mxu0 0.0
    %1287 = vmatprep.subr.mxu0 0.0
    %1288 = vmatpush1.msra.mxu0 0.0
    %1289 = vmatprep.subr.mxu0 0.0
    %1290 = vmatpush1.msra.mxu0 0.0
    %1291 = vmatprep.subr.mxu0 0.0
    %1292 = vmatpush1.msra.mxu0 0.0
    %1293 = vmatprep.subr.mxu0 0.0
    %1294 = vmatpush1.msra.mxu0 %v999
    %1295 = vmatprep.subr.mxu0 0.0
    %1296 = vmatpush1.msra.mxu0 %v994
    %1297 = vmatprep.subr.mxu0 0.0
    %1298 = vmatpush1.msra.mxu0 %v764
    %1299 = vmatprep.subr.mxu0 0.0
    %1300 = vmatpush1.msra.mxu0 %v759
    %1301 = vmatprep.subr.mxu0 0.0
    %1302 = vmatpush1.msra.mxu0 %v529
    %1303 = vmatprep.subr.mxu0 0.0
    %1304 = vmatpush1.msra.mxu0 %v524
    %1305 = vmatprep.subr.mxu0 0.0
    %1306 = vmatpush1.msra.mxu0 %v294
    %1307 = vmatprep.subr.mxu0 0.0
    %1308 = vmatpush1.msra.mxu0 %v289
    %1309 = vmatprep.subr.mxu0 0.0
    %1310 = vmatpush2.msra.mxu0 0.0
    %1311 = vmatprep.subr.mxu0 0.0
    %1312 = vmatpush2.msra.mxu0 0.0
    %1313 = vmatprep.subr.mxu0 0.0
    %1314 = vmatpush2.msra.mxu0 0.0
    %1315 = vmatprep.subr.mxu0 0.0
    %1316 = vmatpush2.msra.mxu0 0.0
    %1317 = vmatprep.subr.mxu0 0.0
    %1318 = vmatpush2.msra.mxu0 0.0
    %1319 = vmatprep.subr.mxu0 0.0
    %1320 = vmatpush2.msra.mxu0 0.0
    %1321 = vmatprep.subr.mxu0 0.0
    %1322 = vmatpush2.msra.mxu0 0.0
    %1323 = vmatprep.subr.mxu0 0.0
    %1324 = vmatpush2.msra.mxu0 0.0
    %1325 = vmatprep.subr.mxu0 0.0
    %1326 = vmatpush2.msra.mxu0 0.0
    %1327 = vmatprep.subr.mxu0 0.0
    %1328 = vmatpush2.msra.mxu0 0.0
    %1329 = vmatprep.subr.mxu0 0.0
    %1330 = vmatpush2.msra.mxu0 0.0
    %1331 = vmatprep.subr.mxu0 0.0
    %1332 = vmatpush2.msra.mxu0 0.0
    %1333 = vmatprep.subr.mxu0 0.0
    %1334 = vmatpush2.msra.mxu0 0.0
    %1335 = vmatprep.subr.mxu0 0.0
    %1336 = vmatpush2.msra.mxu0 0.0
    %1337 = vmatprep.subr.mxu0 0.0
    %1338 = vmatpush2.msra.mxu0 0.0
    %1339 = vmatprep.subr.mxu0 0.0
    %1340 = vmatpush2.msra.mxu0 0.0
    %1341 = vmatprep.mubr.f32.mxu0 0.0
    %1342 = vmatmul.mubr.f32.gmra.mxu0 %v1254
    %v1343 = vpop.f32.mrf.mxu0
    %v1344 = vadd.f32 0.0, %v1343
    %v1345 = vpop.f32.mrf.mxu0
    %1346 = vmatprep.mubr.f32.mxu0 0.0
    %1347 = vmatmul.mubr.f32.gmra.mxu0 %v1257
    %v1348 = vpop.f32.mrf.mxu0
    %v1349 = vadd.f32 0.0, %v1348
    %v1350 = vpop.f32.mrf.mxu0
    %1351 = vmatprep.mubr.f32.mxu0 0.0
    %1352 = vmatmul.mubr.f32.gmra.mxu0 %v1260
    %v1353 = vpop.f32.mrf.mxu0
    %v1354 = vadd.f32 0.0, %v1353
    %v1355 = vpop.f32.mrf.mxu0
    %1356 = vmatprep.mubr.f32.mxu0 0.0
    %1357 = vmatmul.mubr.f32.gmra.mxu0 %v1263
    %v1358 = vpop.f32.mrf.mxu0
    %v1359 = vadd.f32 0.0, %v1358
    %v1360 = vpop.f32.mrf.mxu0
    %1361 = vmatprep.mubr.f32.mxu0 0.0
    %1362 = vmatmul.mubr.f32.gmra.mxu0 %v1266
    %v1363 = vpop.f32.mrf.mxu0
    %v1364 = vadd.f32 0.0, %v1363
    %v1365 = vpop.f32.mrf.mxu0
    %1366 = vmatprep.mubr.f32.mxu0 0.0
    %1367 = vmatmul.mubr.f32.gmra.mxu0 %v1269
    %v1368 = vpop.f32.mrf.mxu0
    %v1369 = vadd.f32 0.0, %v1368
    %v1370 = vpop.f32.mrf.mxu0
    %1371 = vmatprep.mubr.f32.mxu0 0.0
    %1372 = vmatmul.mubr.f32.gmra.mxu0 %v1272
    %v1373 = vpop.f32.mrf.mxu0
    %v1374 = vadd.f32 0.0, %v1373
    %v1375 = vpop.f32.mrf.mxu0
    %1376 = vmatprep.mubr.f32.mxu0 0.0
    %1377 = vmatmul.mubr.f32.gmra.mxu0 %v1275
    %v1378 = vpop.f32.mrf.mxu0
    %v1379 = vadd.f32 0.0, %v1378
    %v1380 = vpop.f32.mrf.mxu0
    %1381 = vdwg.mxu0
    %v1382 = vld [vmem:[%s5] sm:$0xff]
    %s1383 = scalar_lea.vmem %s5, 8
    %v1384 = vld [vmem:[%s1383] sm:$0xff]
    %v1386 = vsel %vm1010, %v1354, 0
    %v1389 = vsel %vm1010, %v1359, 0
    %1391 = vmatprep.subr.mxu0 0.0
    %1392 = vmatpush1.msra.mxu0 0.0
    %1393 = vmatprep.subr.mxu0 0.0
    %1394 = vmatpush1.msra.mxu0 0.0
    %1395 = vmatprep.subr.mxu0 0.0
    %1396 = vmatpush1.msra.mxu0 0.0
    %1397 = vmatprep.subr.mxu0 0.0
    %1398 = vmatpush1.msra.mxu0 0.0
    %1399 = vmatprep.subr.mxu0 0.0
    %1400 = vmatpush1.msra.mxu0 0.0
    %1401 = vmatprep.subr.mxu0 0.0
    %1402 = vmatpush1.msra.mxu0 0.0
    %1403 = vmatprep.subr.mxu0 0.0
    %1404 = vmatpush1.msra.mxu0 0.0
    %1405 = vmatprep.subr.mxu0 0.0
    %1406 = vmatpush1.msra.mxu0 0.0
    %1407 = vmatprep.subr.mxu0 0.0
    %1408 = vmatpush1.msra.mxu0 0.0
    %1409 = vmatprep.subr.mxu0 0.0
    %1410 = vmatpush1.msra.mxu0 0.0
    %1411 = vmatprep.subr.mxu0 0.0
    %1412 = vmatpush1.msra.mxu0 0.0
    %1413 = vmatprep.subr.mxu0 0.0
    %1414 = vmatpush1.msra.mxu0 0.0
    %1415 = vmatprep.subr.mxu0 0.0
    %1416 = vmatpush1.msra.mxu0 0.0
    %1417 = vmatprep.subr.mxu0 0.0
    %1418 = vmatpush1.msra.mxu0 0.0
    %1419 = vmatprep.subr.mxu0 0.0
    %1420 = vmatpush1.msra.mxu0 0.0
    %1421 = vmatprep.subr.mxu0 0.0
    %1422 = vmatpush1.msra.mxu0 %v1384
    %1423 = vmatprep.subr.mxu0 0.0
    %1424 = vmatpush2.msra.mxu0 0.0
    %1425 = vmatprep.subr.mxu0 0.0
    %1426 = vmatpush2.msra.mxu0 0.0
    %1427 = vmatprep.subr.mxu0 0.0
    %1428 = vmatpush2.msra.mxu0 0.0
    %1429 = vmatprep.subr.mxu0 0.0
    %1430 = vmatpush2.msra.mxu0 0.0
    %1431 = vmatprep.subr.mxu0 0.0
    %1432 = vmatpush2.msra.mxu0 0.0
    %1433 = vmatprep.subr.mxu0 0.0
    %1434 = vmatpush2.msra.mxu0 0.0
    %1435 = vmatprep.subr.mxu0 0.0
    %1436 = vmatpush2.msra.mxu0 0.0
    %1437 = vmatprep.subr.mxu0 0.0
    %1438 = vmatpush2.msra.mxu0 0.0
    %1439 = vmatprep.subr.mxu0 0.0
    %1440 = vmatpush2.msra.mxu0 0.0
    %1441 = vmatprep.subr.mxu0 0.0
    %1442 = vmatpush2.msra.mxu0 0.0
    %1443 = vmatprep.subr.mxu0 0.0
    %1444 = vmatpush2.msra.mxu0 0.0
    %1445 = vmatprep.subr.mxu0 0.0
    %1446 = vmatpush2.msra.mxu0 0.0
    %1447 = vmatprep.subr.mxu0 0.0
    %1448 = vmatpush2.msra.mxu0 0.0
    %1449 = vmatprep.subr.mxu0 0.0
    %1450 = vmatpush2.msra.mxu0 0.0
    %1451 = vmatprep.subr.mxu0 0.0
    %1452 = vmatpush2.msra.mxu0 0.0
    %1453 = vmatprep.subr.mxu0 0.0
    %1454 = vmatpush2.msra.mxu0 0.0
    %1455 = vmatprep.mubr.f32.mxu0 0.0
    %1456 = vmatmul.mubr.f32.gmra.mxu0 %v1386
    %v1457 = vpop.f32.mrf.mxu0
    %v1458 = vadd.f32 0.0, %v1457
    %v1459 = vpop.f32.mrf.mxu0
    %1460 = vmatprep.mubr.f32.mxu0 0.0
    %1461 = vmatmul.mubr.f32.gmra.mxu0 %v1389
    %v1462 = vpop.f32.mrf.mxu0
    %v1463 = vadd.f32 0.0, %v1462
    %v1464 = vpop.f32.mrf.mxu0
    %1465 = vdwg.mxu0
    %v1467 = vsel %vm1010, %v1344, 0
    %v1470 = vsel %vm1010, %v1349, 0
    %1472 = vmatprep.subr.mxu0 0.0
    %1473 = vmatpush1.msra.mxu0 0.0
    %1474 = vmatprep.subr.mxu0 0.0
    %1475 = vmatpush1.msra.mxu0 0.0
    %1476 = vmatprep.subr.mxu0 0.0
    %1477 = vmatpush1.msra.mxu0 0.0
    %1478 = vmatprep.subr.mxu0 0.0
    %1479 = vmatpush1.msra.mxu0 0.0
    %1480 = vmatprep.subr.mxu0 0.0
    %1481 = vmatpush1.msra.mxu0 0.0
    %1482 = vmatprep.subr.mxu0 0.0
    %1483 = vmatpush1.msra.mxu0 0.0
    %1484 = vmatprep.subr.mxu0 0.0
    %1485 = vmatpush1.msra.mxu0 0.0
    %1486 = vmatprep.subr.mxu0 0.0
    %1487 = vmatpush1.msra.mxu0 0.0
    %1488 = vmatprep.subr.mxu0 0.0
    %1489 = vmatpush1.msra.mxu0 0.0
    %1490 = vmatprep.subr.mxu0 0.0
    %1491 = vmatpush1.msra.mxu0 0.0
    %1492 = vmatprep.subr.mxu0 0.0
    %1493 = vmatpush1.msra.mxu0 0.0
    %1494 = vmatprep.subr.mxu0 0.0
    %1495 = vmatpush1.msra.mxu0 0.0
    %1496 = vmatprep.subr.mxu0 0.0
    %1497 = vmatpush1.msra.mxu0 0.0
    %1498 = vmatprep.subr.mxu0 0.0
    %1499 = vmatpush1.msra.mxu0 0.0
    %1500 = vmatprep.subr.mxu0 0.0
    %1501 = vmatpush1.msra.mxu0 0.0
    %1502 = vmatprep.subr.mxu0 0.0
    %1503 = vmatpush1.msra.mxu0 %v1382
    %1504 = vmatprep.subr.mxu0 0.0
    %1505 = vmatpush2.msra.mxu0 0.0
    %1506 = vmatprep.subr.mxu0 0.0
    %1507 = vmatpush2.msra.mxu0 0.0
    %1508 = vmatprep.subr.mxu0 0.0
    %1509 = vmatpush2.msra.mxu0 0.0
    %1510 = vmatprep.subr.mxu0 0.0
    %1511 = vmatpush2.msra.mxu0 0.0
    %1512 = vmatprep.subr.mxu0 0.0
    %1513 = vmatpush2.msra.mxu0 0.0
    %1514 = vmatprep.subr.mxu0 0.0
    %1515 = vmatpush2.msra.mxu0 0.0
    %1516 = vmatprep.subr.mxu0 0.0
    %1517 = vmatpush2.msra.mxu0 0.0
    %1518 = vmatprep.subr.mxu0 0.0
    %1519 = vmatpush2.msra.mxu0 0.0
    %1520 = vmatprep.subr.mxu0 0.0
    %1521 = vmatpush2.msra.mxu0 0.0
    %1522 = vmatprep.subr.mxu0 0.0
    %1523 = vmatpush2.msra.mxu0 0.0
    %1524 = vmatprep.subr.mxu0 0.0
    %1525 = vmatpush2.msra.mxu0 0.0
    %1526 = vmatprep.subr.mxu0 0.0
    %1527 = vmatpush2.msra.mxu0 0.0
    %1528 = vmatprep.subr.mxu0 0.0
    %1529 = vmatpush2.msra.mxu0 0.0
    %1530 = vmatprep.subr.mxu0 0.0
    %1531 = vmatpush2.msra.mxu0 0.0
    %1532 = vmatprep.subr.mxu0 0.0
    %1533 = vmatpush2.msra.mxu0 0.0
    %1534 = vmatprep.subr.mxu0 0.0
    %1535 = vmatpush2.msra.mxu0 0.0
    %1536 = vmatprep.mubr.f32.mxu0 0.0
    %1537 = vmatmul.mubr.f32.gmra.mxu0 %v1467
    %v1538 = vpop.f32.mrf.mxu0
    %v1539 = vadd.f32 %v1458, %v1538
    %v1540 = vpop.f32.mrf.mxu0
    %1541 = vmatprep.mubr.f32.mxu0 0.0
    %1542 = vmatmul.mubr.f32.gmra.mxu0 %v1470
    %v1543 = vpop.f32.mrf.mxu0
    %v1544 = vadd.f32 %v1463, %v1543
    %v1545 = vpop.f32.mrf.mxu0
    %1546 = vdwg.mxu0
    %s1547 = scalar_lea.vmem %s5, 16
    %v1548 = vld [vmem:[%s1547] sm:$0xff]
    %v1550 = vsel %vm1010, %v1364, 0
    %v1553 = vsel %vm1010, %v1369, 0
    %1555 = vmatprep.subr.mxu0 0.0
    %1556 = vmatpush1.msra.mxu0 0.0
    %1557 = vmatprep.subr.mxu0 0.0
    %1558 = vmatpush1.msra.mxu0 0.0
    %1559 = vmatprep.subr.mxu0 0.0
    %1560 = vmatpush1.msra.mxu0 0.0
    %1561 = vmatprep.subr.mxu0 0.0
    %1562 = vmatpush1.msra.mxu0 0.0
    %1563 = vmatprep.subr.mxu0 0.0
    %1564 = vmatpush1.msra.mxu0 0.0
    %1565 = vmatprep.subr.mxu0 0.0
    %1566 = vmatpush1.msra.mxu0 0.0
    %1567 = vmatprep.subr.mxu0 0.0
    %1568 = vmatpush1.msra.mxu0 0.0
    %1569 = vmatprep.subr.mxu0 0.0
    %1570 = vmatpush1.msra.mxu0 0.0
    %1571 = vmatprep.subr.mxu0 0.0
    %1572 = vmatpush1.msra.mxu0 0.0
    %1573 = vmatprep.subr.mxu0 0.0
    %1574 = vmatpush1.msra.mxu0 0.0
    %1575 = vmatprep.subr.mxu0 0.0
    %1576 = vmatpush1.msra.mxu0 0.0
    %1577 = vmatprep.subr.mxu0 0.0
    %1578 = vmatpush1.msra.mxu0 0.0
    %1579 = vmatprep.subr.mxu0 0.0
    %1580 = vmatpush1.msra.mxu0 0.0
    %1581 = vmatprep.subr.mxu0 0.0
    %1582 = vmatpush1.msra.mxu0 0.0
    %1583 = vmatprep.subr.mxu0 0.0
    %1584 = vmatpush1.msra.mxu0 0.0
    %1585 = vmatprep.subr.mxu0 0.0
    %1586 = vmatpush1.msra.mxu0 %v1548
    %1587 = vmatprep.subr.mxu0 0.0
    %1588 = vmatpush2.msra.mxu0 0.0
    %1589 = vmatprep.subr.mxu0 0.0
    %1590 = vmatpush2.msra.mxu0 0.0
    %1591 = vmatprep.subr.mxu0 0.0
    %1592 = vmatpush2.msra.mxu0 0.0
    %1593 = vmatprep.subr.mxu0 0.0
    %1594 = vmatpush2.msra.mxu0 0.0
    %1595 = vmatprep.subr.mxu0 0.0
    %1596 = vmatpush2.msra.mxu0 0.0
    %1597 = vmatprep.subr.mxu0 0.0
    %1598 = vmatpush2.msra.mxu0 0.0
    %1599 = vmatprep.subr.mxu0 0.0
    %1600 = vmatpush2.msra.mxu0 0.0
    %1601 = vmatprep.subr.mxu0 0.0
    %1602 = vmatpush2.msra.mxu0 0.0
    %1603 = vmatprep.subr.mxu0 0.0
    %1604 = vmatpush2.msra.mxu0 0.0
    %1605 = vmatprep.subr.mxu0 0.0
    %1606 = vmatpush2.msra.mxu0 0.0
    %1607 = vmatprep.subr.mxu0 0.0
    %1608 = vmatpush2.msra.mxu0 0.0
    %1609 = vmatprep.subr.mxu0 0.0
    %1610 = vmatpush2.msra.mxu0 0.0
    %1611 = vmatprep.subr.mxu0 0.0
    %1612 = vmatpush2.msra.mxu0 0.0
    %1613 = vmatprep.subr.mxu0 0.0
    %1614 = vmatpush2.msra.mxu0 0.0
    %1615 = vmatprep.subr.mxu0 0.0
    %1616 = vmatpush2.msra.mxu0 0.0
    %1617 = vmatprep.subr.mxu0 0.0
    %1618 = vmatpush2.msra.mxu0 0.0
    %1619 = vmatprep.mubr.f32.mxu0 0.0
    %1620 = vmatmul.mubr.f32.gmra.mxu0 %v1550
    %v1621 = vpop.f32.mrf.mxu0
    %v1622 = vadd.f32 0.0, %v1621
    %v1623 = vpop.f32.mrf.mxu0
    %1624 = vmatprep.mubr.f32.mxu0 0.0
    %1625 = vmatmul.mubr.f32.gmra.mxu0 %v1553
    %v1626 = vpop.f32.mrf.mxu0
    %v1627 = vadd.f32 0.0, %v1626
    %v1628 = vpop.f32.mrf.mxu0
    %1629 = vdwg.mxu0
    %v1630 = vadd.f32 %v1539, %v1622
    %v1631 = vadd.f32 %v1544, %v1627
    %s1632 = scalar_lea.vmem %s5, 24
    %v1633 = vld [vmem:[%s1632] sm:$0xff]
    %v1635 = vsel %vm1010, %v1374, 0
    %v1638 = vsel %vm1010, %v1379, 0
    %1640 = vmatprep.subr.mxu0 0.0
    %1641 = vmatpush1.msra.mxu0 0.0
    %1642 = vmatprep.subr.mxu0 0.0
    %1643 = vmatpush1.msra.mxu0 0.0
    %1644 = vmatprep.subr.mxu0 0.0
    %1645 = vmatpush1.msra.mxu0 0.0
    %1646 = vmatprep.subr.mxu0 0.0
    %1647 = vmatpush1.msra.mxu0 0.0
    %1648 = vmatprep.subr.mxu0 0.0
    %1649 = vmatpush1.msra.mxu0 0.0
    %1650 = vmatprep.subr.mxu0 0.0
    %1651 = vmatpush1.msra.mxu0 0.0
    %1652 = vmatprep.subr.mxu0 0.0
    %1653 = vmatpush1.msra.mxu0 0.0
    %1654 = vmatprep.subr.mxu0 0.0
    %1655 = vmatpush1.msra.mxu0 0.0
    %1656 = vmatprep.subr.mxu0 0.0
    %1657 = vmatpush1.msra.mxu0 0.0
    %1658 = vmatprep.subr.mxu0 0.0
    %1659 = vmatpush1.msra.mxu0 0.0
    %1660 = vmatprep.subr.mxu0 0.0
    %1661 = vmatpush1.msra.mxu0 0.0
    %1662 = vmatprep.subr.mxu0 0.0
    %1663 = vmatpush1.msra.mxu0 0.0
    %1664 = vmatprep.subr.mxu0 0.0
    %1665 = vmatpush1.msra.mxu0 0.0
    %1666 = vmatprep.subr.mxu0 0.0
    %1667 = vmatpush1.msra.mxu0 0.0
    %1668 = vmatprep.subr.mxu0 0.0
    %1669 = vmatpush1.msra.mxu0 0.0
    %1670 = vmatprep.subr.mxu0 0.0
    %1671 = vmatpush1.msra.mxu0 %v1633
    %1672 = vmatprep.subr.mxu0 0.0
    %1673 = vmatpush2.msra.mxu0 0.0
    %1674 = vmatprep.subr.mxu0 0.0
    %1675 = vmatpush2.msra.mxu0 0.0
    %1676 = vmatprep.subr.mxu0 0.0
    %1677 = vmatpush2.msra.mxu0 0.0
    %1678 = vmatprep.subr.mxu0 0.0
    %1679 = vmatpush2.msra.mxu0 0.0
    %1680 = vmatprep.subr.mxu0 0.0
    %1681 = vmatpush2.msra.mxu0 0.0
    %1682 = vmatprep.subr.mxu0 0.0
    %1683 = vmatpush2.msra.mxu0 0.0
    %1684 = vmatprep.subr.mxu0 0.0
    %1685 = vmatpush2.msra.mxu0 0.0
    %1686 = vmatprep.subr.mxu0 0.0
    %1687 = vmatpush2.msra.mxu0 0.0
    %1688 = vmatprep.subr.mxu0 0.0
    %1689 = vmatpush2.msra.mxu0 0.0
    %1690 = vmatprep.subr.mxu0 0.0
    %1691 = vmatpush2.msra.mxu0 0.0
    %1692 = vmatprep.subr.mxu0 0.0
    %1693 = vmatpush2.msra.mxu0 0.0
    %1694 = vmatprep.subr.mxu0 0.0
    %1695 = vmatpush2.msra.mxu0 0.0
    %1696 = vmatprep.subr.mxu0 0.0
    %1697 = vmatpush2.msra.mxu0 0.0
    %1698 = vmatprep.subr.mxu0 0.0
    %1699 = vmatpush2.msra.mxu0 0.0
    %1700 = vmatprep.subr.mxu0 0.0
    %1701 = vmatpush2.msra.mxu0 0.0
    %1702 = vmatprep.subr.mxu0 0.0
    %1703 = vmatpush2.msra.mxu0 0.0
    %1704 = vmatprep.mubr.f32.mxu0 0.0
    %1705 = vmatmul.mubr.f32.gmra.mxu0 %v1635
    %v1706 = vpop.f32.mrf.mxu0
    %v1707 = vadd.f32 0.0, %v1706
    %v1708 = vpop.f32.mrf.mxu0
    %1709 = vmatprep.mubr.f32.mxu0 0.0
    %1710 = vmatmul.mubr.f32.gmra.mxu0 %v1638
    %v1711 = vpop.f32.mrf.mxu0
    %v1712 = vadd.f32 0.0, %v1711
    %v1713 = vpop.f32.mrf.mxu0
    %1714 = vdwg.mxu0
    %v1715 = vadd.f32 %v1630, %v1707
    %v1716 = vadd.f32 %v1631, %v1712
    %v1717 = vld [vmem:[%s7] sm:$0x1]
    %v1718 = vlaneseq
    %v1719 = vshrl.u32 %v1718, 7
    %v1720 = vsub.s32 0, %v1719
    %v1721 = vrot.slane %v1717, %v1720
    %v1722 = vadd.f32 %v1715, %v1721
    %v1723 = vadd.f32 %v1716, %v1721
    %v1724 = vadd.f32 %v1722, %v39
    %v1725 = vadd.f32 %v1723, %v40
    %v1726 = vld [vmem:[%s7 + $0x1] sm:$0x1]
    %v1727 = vld [vmem:[%s7 + $0x2] sm:$0x1]
    %v1728 = vsel %vm49, %v1724, 0.0
    %1729 = vadd.xlane.f32.xlu0 %v1728
    %v1730 = vpop.xlane.xlu0 %1729
    %v1731 = vsel %vm49, %v1725, 0.0
    %1732 = vadd.xlane.f32.xlu0 %v1731
    %v1733 = vpop.xlane.xlu0 %1732
    %v1734 = vrcp.pop 32.0
    %v1735 = vmul.f32 %v1730, %v1734
    %v1736 = vmul.f32 %v1733, %v1734
    %v1737 = vsub.f32 %v1724, %v1735
    %v1738 = vsub.f32 %v1725, %v1736
    %v1739 = vmul.f32 %v1737, %v1737
    %v1740 = vmul.f32 %v1738, %v1738
    %v1741 = vsel %vm49, %v1739, 0.0
    %1742 = vadd.xlane.f32.xlu0 %v1741
    %v1743 = vpop.xlane.xlu0 %1742
    %v1744 = vsel %vm49, %v1740, 0.0
    %1745 = vadd.xlane.f32.xlu0 %v1744
    %v1746 = vpop.xlane.xlu0 %1745
    %v1747 = vmul.f32 %v1743, %v1734
    %v1748 = vmul.f32 %v1746, %v1734
    %v1749 = vadd.f32 %v1747, 1e-05
    %v1750 = vadd.f32 %v1748, 1e-05
    %v1751 = vrsqrt.pop %v1749
    %v1752 = vrsqrt.pop %v1750
    %v1753 = vmul.f32 %v1737, %v1751
    %v1754 = vmul.f32 %v1738, %v1752
    %v1755 = vlaneseq
    %v1756 = vshrl.u32 %v1755, 7
    %v1757 = vsub.s32 0, %v1756
    %v1758 = vrot.slane %v1726, %v1757
    %v1759 = vmul.f32 %v1753, %v1758
    %v1760 = vmul.f32 %v1754, %v1758
    %v1761 = vlaneseq
    %v1762 = vshrl.u32 %v1761, 7
    %v1763 = vsub.s32 0, %v1762
    %v1764 = vrot.slane %v1727, %v1763
    %v1765 = vadd.f32 %v1759, %v1764
    %v1766 = vadd.f32 %v1760, %v1764
    %v1767 = vld [vmem:[%s9] sm:$0xff]
    %v1768 = vld [vmem:[%s9 + $0x8] sm:$0xff]
    %v1769 = vld [vmem:[%s9 + $0x10] sm:$0xff]
    %v1770 = vld [vmem:[%s9 + $0x18] sm:$0xff]
    %v1771 = vld [vmem:[%s8] sm:$0x1]
    %v1773 = vlaneseq
    %v1774 = vshrl.u32 %v1773, 7
    %v1775 = vsub.s32 0, %v1774
    %v1776 = vrot.slane %v1771, %v1775
    %v1779 = vsel %vm49, %v1765, 0
    %v1782 = vsel %vm49, %v1766, 0
    %1784 = vmatprep.subr.mxu0 0.0
    %1785 = vmatpush1.msra.mxu0 0.0
    %1786 = vmatprep.subr.mxu0 0.0
    %1787 = vmatpush1.msra.mxu0 0.0
    %1788 = vmatprep.subr.mxu0 0.0
    %1789 = vmatpush1.msra.mxu0 0.0
    %1790 = vmatprep.subr.mxu0 0.0
    %1791 = vmatpush1.msra.mxu0 0.0
    %1792 = vmatprep.subr.mxu0 0.0
    %1793 = vmatpush1.msra.mxu0 0.0
    %1794 = vmatprep.subr.mxu0 0.0
    %1795 = vmatpush1.msra.mxu0 0.0
    %1796 = vmatprep.subr.mxu0 0.0
    %1797 = vmatpush1.msra.mxu0 0.0
    %1798 = vmatprep.subr.mxu0 0.0
    %1799 = vmatpush1.msra.mxu0 0.0
    %1800 = vmatprep.subr.mxu0 0.0
    %1801 = vmatpush1.msra.mxu0 0.0
    %1802 = vmatprep.subr.mxu0 0.0
    %1803 = vmatpush1.msra.mxu0 0.0
    %1804 = vmatprep.subr.mxu0 0.0
    %1805 = vmatpush1.msra.mxu0 0.0
    %1806 = vmatprep.subr.mxu0 0.0
    %1807 = vmatpush1.msra.mxu0 0.0
    %1808 = vmatprep.subr.mxu0 0.0
    %1809 = vmatpush1.msra.mxu0 %v1770
    %1810 = vmatprep.subr.mxu0 0.0
    %1811 = vmatpush1.msra.mxu0 %v1769
    %1812 = vmatprep.subr.mxu0 0.0
    %1813 = vmatpush1.msra.mxu0 %v1768
    %1814 = vmatprep.subr.mxu0 0.0
    %1815 = vmatpush1.msra.mxu0 %v1767
    %1816 = vmatprep.subr.mxu0 0.0
    %1817 = vmatpush2.msra.mxu0 0.0
    %1818 = vmatprep.subr.mxu0 0.0
    %1819 = vmatpush2.msra.mxu0 0.0
    %1820 = vmatprep.subr.mxu0 0.0
    %1821 = vmatpush2.msra.mxu0 0.0
    %1822 = vmatprep.subr.mxu0 0.0
    %1823 = vmatpush2.msra.mxu0 0.0
    %1824 = vmatprep.subr.mxu0 0.0
    %1825 = vmatpush2.msra.mxu0 0.0
    %1826 = vmatprep.subr.mxu0 0.0
    %1827 = vmatpush2.msra.mxu0 0.0
    %1828 = vmatprep.subr.mxu0 0.0
    %1829 = vmatpush2.msra.mxu0 0.0
    %1830 = vmatprep.subr.mxu0 0.0
    %1831 = vmatpush2.msra.mxu0 0.0
    %1832 = vmatprep.subr.mxu0 0.0
    %1833 = vmatpush2.msra.mxu0 0.0
    %1834 = vmatprep.subr.mxu0 0.0
    %1835 = vmatpush2.msra.mxu0 0.0
    %1836 = vmatprep.subr.mxu0 0.0
    %1837 = vmatpush2.msra.mxu0 0.0
    %1838 = vmatprep.subr.mxu0 0.0
    %1839 = vmatpush2.msra.mxu0 0.0
    %1840 = vmatprep.subr.mxu0 0.0
    %1841 = vmatpush2.msra.mxu0 0.0
    %1842 = vmatprep.subr.mxu0 0.0
    %1843 = vmatpush2.msra.mxu0 0.0
    %1844 = vmatprep.subr.mxu0 0.0
    %1845 = vmatpush2.msra.mxu0 0.0
    %1846 = vmatprep.subr.mxu0 0.0
    %1847 = vmatpush2.msra.mxu0 0.0
    %1848 = vmatprep.mubr.f32.mxu0 0.0
    %1849 = vmatmul.mubr.f32.gmra.mxu0 %v1779
    %v1850 = vpop.f32.mrf.mxu0
    %v1851 = vadd.f32 %v1776, %v1850
    %v1852 = vpop.f32.mrf.mxu0
    %1853 = vmatprep.mubr.f32.mxu0 0.0
    %1854 = vmatmul.mubr.f32.gmra.mxu0 %v1782
    %v1855 = vpop.f32.mrf.mxu0
    %v1856 = vadd.f32 %v1776, %v1855
    %v1857 = vpop.f32.mrf.mxu0
    %1858 = vdwg.mxu0
    %v1859 = vmax.f32 %v1851, 0.0
    %v1860 = vmax.f32 %v1856, 0.0
    %v1861 = vld [vmem:[%s10] sm:$0xff]
    %v1862 = vld [vmem:[%s10 + $0x8] sm:$0xff]
    %v1863 = vld [vmem:[%s10 + $0x10] sm:$0xff]
    %v1864 = vld [vmem:[%s10 + $0x18] sm:$0xff]
    %v1865 = vld [vmem:[%s10 + $0x20] sm:$0xff]
    %v1866 = vld [vmem:[%s10 + $0x28] sm:$0xff]
    %v1867 = vld [vmem:[%s10 + $0x30] sm:$0xff]
    %v1868 = vld [vmem:[%s10 + $0x38] sm:$0xff]
    %v1869 = vld [vmem:[%s7 + $0x3] sm:$0x1]
    %v1870 = vlaneseq
    %v1871 = vshrl.u32 %v1870, 7
    %v1872 = vsub.s32 0, %v1871
    %v1873 = vrot.slane %v1869, %v1872
    %v1875 = vsel %vm1164, %v1859, 0
    %v1878 = vsel %vm1164, %v1860, 0
    %1880 = vmatprep.subr.mxu0 0.0
    %1881 = vmatpush1.msra.mxu0 0.0
    %1882 = vmatprep.subr.mxu0 0.0
    %1883 = vmatpush1.msra.mxu0 0.0
    %1884 = vmatprep.subr.mxu0 0.0
    %1885 = vmatpush1.msra.mxu0 0.0
    %1886 = vmatprep.subr.mxu0 0.0
    %1887 = vmatpush1.msra.mxu0 0.0
    %1888 = vmatprep.subr.mxu0 0.0
    %1889 = vmatpush1.msra.mxu0 0.0
    %1890 = vmatprep.subr.mxu0 0.0
    %1891 = vmatpush1.msra.mxu0 0.0
    %1892 = vmatprep.subr.mxu0 0.0
    %1893 = vmatpush1.msra.mxu0 0.0
    %1894 = vmatprep.subr.mxu0 0.0
    %1895 = vmatpush1.msra.mxu0 0.0
    %1896 = vmatprep.subr.mxu0 0.0
    %1897 = vmatpush1.msra.mxu0 %v1868
    %1898 = vmatprep.subr.mxu0 0.0
    %1899 = vmatpush1.msra.mxu0 %v1867
    %1900 = vmatprep.subr.mxu0 0.0
    %1901 = vmatpush1.msra.mxu0 %v1866
    %1902 = vmatprep.subr.mxu0 0.0
    %1903 = vmatpush1.msra.mxu0 %v1865
    %1904 = vmatprep.subr.mxu0 0.0
    %1905 = vmatpush1.msra.mxu0 %v1864
    %1906 = vmatprep.subr.mxu0 0.0
    %1907 = vmatpush1.msra.mxu0 %v1863
    %1908 = vmatprep.subr.mxu0 0.0
    %1909 = vmatpush1.msra.mxu0 %v1862
    %1910 = vmatprep.subr.mxu0 0.0
    %1911 = vmatpush1.msra.mxu0 %v1861
    %1912 = vmatprep.subr.mxu0 0.0
    %1913 = vmatpush2.msra.mxu0 0.0
    %1914 = vmatprep.subr.mxu0 0.0
    %1915 = vmatpush2.msra.mxu0 0.0
    %1916 = vmatprep.subr.mxu0 0.0
    %1917 = vmatpush2.msra.mxu0 0.0
    %1918 = vmatprep.subr.mxu0 0.0
    %1919 = vmatpush2.msra.mxu0 0.0
    %1920 = vmatprep.subr.mxu0 0.0
    %1921 = vmatpush2.msra.mxu0 0.0
    %1922 = vmatprep.subr.mxu0 0.0
    %1923 = vmatpush2.msra.mxu0 0.0
    %1924 = vmatprep.subr.mxu0 0.0
    %1925 = vmatpush2.msra.mxu0 0.0
    %1926 = vmatprep.subr.mxu0 0.0
    %1927 = vmatpush2.msra.mxu0 0.0
    %1928 = vmatprep.subr.mxu0 0.0
    %1929 = vmatpush2.msra.mxu0 0.0
    %1930 = vmatprep.subr.mxu0 0.0
    %1931 = vmatpush2.msra.mxu0 0.0
    %1932 = vmatprep.subr.mxu0 0.0
    %1933 = vmatpush2.msra.mxu0 0.0
    %1934 = vmatprep.subr.mxu0 0.0
    %1935 = vmatpush2.msra.mxu0 0.0
    %1936 = vmatprep.subr.mxu0 0.0
    %1937 = vmatpush2.msra.mxu0 0.0
    %1938 = vmatprep.subr.mxu0 0.0
    %1939 = vmatpush2.msra.mxu0 0.0
    %1940 = vmatprep.subr.mxu0 0.0
    %1941 = vmatpush2.msra.mxu0 0.0
    %1942 = vmatprep.subr.mxu0 0.0
    %1943 = vmatpush2.msra.mxu0 0.0
    %1944 = vmatprep.mubr.f32.mxu0 0.0
    %1945 = vmatmul.mubr.f32.gmra.mxu0 %v1875
    %v1946 = vpop.f32.mrf.mxu0
    %v1947 = vadd.f32 %v1873, %v1946
    %v1948 = vpop.f32.mrf.mxu0
    %1949 = vmatprep.mubr.f32.mxu0 0.0
    %1950 = vmatmul.mubr.f32.gmra.mxu0 %v1878
    %v1951 = vpop.f32.mrf.mxu0
    %v1952 = vadd.f32 %v1873, %v1951
    %v1953 = vpop.f32.mrf.mxu0
    %1954 = vdwg.mxu0
    %v1955 = vadd.f32 %v1947, %v1765
    %v1956 = vadd.f32 %v1952, %v1766
    %v1957 = vld [vmem:[%s7 + $0x4] sm:$0x1]
    %v1958 = vld [vmem:[%s7 + $0x5] sm:$0x1]
    %v1959 = vsel %vm49, %v1955, 0.0
    %1960 = vadd.xlane.f32.xlu0 %v1959
    %v1961 = vpop.xlane.xlu0 %1960
    %v1962 = vsel %vm49, %v1956, 0.0
    %1963 = vadd.xlane.f32.xlu0 %v1962
    %v1964 = vpop.xlane.xlu0 %1963
    %v1965 = vmul.f32 %v1961, %v1734
    %v1966 = vmul.f32 %v1964, %v1734
    %v1967 = vsub.f32 %v1955, %v1965
    %v1968 = vsub.f32 %v1956, %v1966
    %v1969 = vmul.f32 %v1967, %v1967
    %v1970 = vmul.f32 %v1968, %v1968
    %v1971 = vsel %vm49, %v1969, 0.0
    %1972 = vadd.xlane.f32.xlu0 %v1971
    %v1973 = vpop.xlane.xlu0 %1972
    %v1974 = vsel %vm49, %v1970, 0.0
    %1975 = vadd.xlane.f32.xlu0 %v1974
    %v1976 = vpop.xlane.xlu0 %1975
    %v1977 = vmul.f32 %v1973, %v1734
    %v1978 = vmul.f32 %v1976, %v1734
    %v1979 = vadd.f32 %v1977, 1e-05
    %v1980 = vadd.f32 %v1978, 1e-05
    %v1981 = vrsqrt.pop %v1979
    %v1982 = vrsqrt.pop %v1980
    %v1983 = vmul.f32 %v1967, %v1981
    %v1984 = vmul.f32 %v1968, %v1982
    %v1985 = vlaneseq
    %v1986 = vshrl.u32 %v1985, 7
    %v1987 = vsub.s32 0, %v1986
    %v1988 = vrot.slane %v1957, %v1987
    %v1989 = vmul.f32 %v1983, %v1988
    %v1990 = vmul.f32 %v1984, %v1988
    %v1991 = vlaneseq
    %v1992 = vshrl.u32 %v1991, 7
    %v1993 = vsub.s32 0, %v1992
    %v1994 = vrot.slane %v1958, %v1993
    %v1995 = vadd.f32 %v1989, %v1994
    %v1996 = vadd.f32 %v1990, %v1994
    %1997 = vst.msk [vmem:[#allocation2] sm:$0xff] %vm49, %v1995
    %1998 = vst.msk [vmem:[#allocation2 + $0x8] sm:$0xff] %vm49, %v1996
    // Predicated region
    $region46: #{transformer_forward.1} parent=1 // pred_check
      _
    $region47: #{transformer_forward.1} parent=1 // pred_check_branch
      %2000 = sbr.rel (0) target = $region49
    $region48: #{transformer_forward.1} parent=1 // pred_region
      %s2002 = ssub.s32 256, 256
      %2003 = vsyncadd [#allocation3], %s2002
      %s2004 = sshll.u32 [#allocation2], 4
      %s2005 = int_to_ptr.vmem [resolvable:$true] %s2004
      %2010 = dma.vmem_to_hbm [thread:$0]  %s2005, 256, %s11, [#allocation3], 128, 128, 8
    $region49: #{transformer_forward.1} parent=1 // pred_fallthru
      _
    // Predicated region
    $region50: #{transformer_forward.1} parent=1 // pred_check
      _
    $region51: #{transformer_forward.1} parent=1 // pred_check_branch
      %2012 = sbr.rel (0) target = $region53
    $region52: #{transformer_forward.1} parent=1 // pred_region
      %2013 = dma.done [#allocation3], 256
    $region53: #{transformer_forward.1} parent=1 // pred_fallthru
      _
    %2014 = vsyncpa [#allocation3], 1

</llo_original>
